<compile_context>
chip_gen: v7x
topology: tpu7x:2x2x1
jax: 0.10.0
libtpu: 0.0.40
codegen_flags: <defaults>
</compile_context>

<pallas_src>
import numpy as np
import jax
import jax.numpy as jnp
from jax.experimental import pallas as pl
from jax.experimental.pallas import tpu as pltpu


def _round_up(x, m):
    return (x + m - 1) // m * m


def textcnn_forward(tokens, params, filter_sizes=(3, 4, 5), batch_tile=None):
    """tokens: (B, L) int32. Returns (B, 1) f32."""
    emb_table = params["embedding"]                          # (V, E)
    B, L = tokens.shape
    E = emb_table.shape[1]
    F = params["conv_b"][0].shape[0]
    nfs = len(filter_sizes)
    fs_max = max(filter_sizes)
    fs_min = min(filter_sizes)

    lout_max = L - fs_min + 1
    lp = _round_up(lout_max, 8)              # pooled time dim (sublane multiple)
    lpad = _round_up(lp + fs_max - 1, 8)     # streamed emb time dim
    n_pad = _round_up(nfs * F, 128)          # lane-dense conv output width

    # Pick batch_tile so M = batch_tile*lp targets 256 (v6e/v7x MXU), but keep
    # >= 2 grid steps when the batch allows it so v7x's 2nd TensorCore is used.
    if batch_tile is None:
        batch_tile = max(1, 256 // lp)
        while (batch_tile > 1 and -(-B // batch_tile) < 2
               and batch_tile * lp > 128):
            batch_tile //= 2
    B_pad = _round_up(B, batch_tile)
    num_tiles = B_pad // batch_tile

    # Embedding gather directly into bf16 (halves intermediate HBM traffic).
    # TODO(synk): at large V/L/E move this gather in-kernel (emb table in HBM
    # via memory_space=pl.ANY + scalar-prefetched token ids + DMA gather).
    emb = jnp.take(emb_table, tokens, axis=0).astype(jnp.bfloat16)  # (B, L, E)
    emb = jnp.pad(emb, ((0, B_pad - B), (0, lpad - L), (0, 0)))     # (B_pad, lpad, E)

    # Pack all conv branches, per tap j, into one (fs_max, E, n_pad) weight:
    # W[j, e, branch*F + f] = conv_w[branch][f, 0, j, e] (zero where j >= fs).
    pad_n = n_pad - nfs * F
    w_blocks, b_cols = [], []
    for fs, w, bias in zip(filter_sizes, params["conv_w"], params["conv_b"]):
        wi = jnp.transpose(w[:, 0], (1, 2, 0))                      # (fs, E, F)
        wi = jnp.pad(wi, ((0, fs_max - fs), (0, 0), (0, 0)))        # (fs_max, E, F)
        w_blocks.append(wi)
        b_cols.append(bias.reshape(1, F))
    w_big = jnp.pad(jnp.concatenate(w_blocks, axis=-1),
                    ((0, 0), (0, 0), (0, pad_n))).astype(jnp.bfloat16)
    b_big = jnp.pad(jnp.concatenate(b_cols, axis=1),
                    ((0, 0), (0, pad_n))).astype(jnp.float32)       # (1, n_pad)

    # Per-lane valid output length (L - fs + 1); 0 for padded lanes.  The mask
    # itself is built in-kernel with broadcasted_iota.
    lout_np = np.zeros((1, n_pad), np.int32)
    for bi, fs in enumerate(filter_sizes):
        lout_np[0, bi * F:(bi + 1) * F] = L - fs + 1
    lout_row = jnp.asarray(lout_np)

    fcw = jnp.pad(params["fc_w"].astype(jnp.float32),
                  ((0, 0), (0, pad_n)))                             # (1, n_pad)
    fcb = params["fc_b"].reshape(1, 1).astype(jnp.float32)          # (1, 1) SMEM

    def kernel(emb_ref, w_ref, b_ref, lout_ref, fcw_ref, fcb_ref, out_ref):
        tb = emb_ref.shape[0]
        e = emb_ref.shape[2]

        # Tap-accumulated conv: one (tb*lp, E) @ (E, n_pad) MXU matmul per tap,
        # f32 accumulation.  Avoids materializing im2col in HBM.
        acc = jnp.zeros((tb * lp, n_pad), jnp.float32)
        for j in range(fs_max):
            xj = emb_ref[:, j:j + lp, :].reshape(tb * lp, e)        # bf16
            acc = acc + jnp.dot(xj, w_ref[j],
                                preferred_element_type=jnp.float32)

        acc = jnp.maximum(acc + b_ref[...], 0.0)                    # bias + ReLU

        # In-kernel validity mask: time index < per-lane Lout.  ReLU >= 0 so
        # zeroing invalid / padded positions preserves the exact max.
        t_idx = jax.lax.broadcasted_iota(jnp.int32, (lp, n_pad), 0)
        mask = (t_idx < lout_ref[...]).astype(jnp.float32)          # (lp, n_pad)
        acc = acc.reshape(tb, lp, n_pad) * mask[None, :, :]
        pooled = jnp.max(acc, axis=1)                               # (tb, n_pad)

        # TODO(synk): Dropout(p=0.5) is identity (inference mode); training
        # mode would need pltpu.prng_seed / prng_random_bits masking.
        # FC (out_features = 1) as a tiny contraction producing a lane-dense
        # (1, tb) row directly (no 1-lane masked store).
        logits = jax.lax.dot_general(
            fcw_ref[...], pooled,
            dimension_numbers=(((1,), (1,)), ((), ())),
            preferred_element_type=jnp.float32)                     # (1, tb)
        logits = logits + fcb_ref[0, 0]
        out_ref[...] = logits.reshape(1, 1, tb).astype(out_ref.dtype)

    # TODO(synk): if F grows (W beyond ~hundreds of KB), mark the invariant
    # operands (w_big/b_big/lout_row/fcw) pipeline_mode=pl.Buffered(1) and set
    # vmem_limit_bytes explicitly (v7x has only 64 MiB VMEM / 32 MiB scoped).
    fn = pl.pallas_call(
        kernel,
        out_shape=jax.ShapeDtypeStruct((num_tiles, 1, batch_tile), jnp.float32),
        grid=(num_tiles,),
        in_specs=[
            pl.BlockSpec((batch_tile, lpad, E), lambda i: (i, 0, 0)),  # emb tile
            pl.BlockSpec((fs_max, E, n_pad), lambda i: (0, 0, 0)),     # conv W
            pl.BlockSpec((1, n_pad), lambda i: (0, 0)),                # conv bias
            pl.BlockSpec((1, n_pad), lambda i: (0, 0)),                # per-lane Lout
            pl.BlockSpec((1, n_pad), lambda i: (0, 0)),                # fc weight row
            pl.BlockSpec(memory_space=pltpu.MemorySpace.SMEM),         # fc bias
        ],
        out_specs=pl.BlockSpec((1, 1, batch_tile), lambda i: (i, 0, 0)),
        compiler_params=pltpu.CompilerParams(
            dimension_semantics=("parallel",)),
    )
    out = fn(emb, w_big, b_big, lout_row, fcw, fcb)                  # (T, 1, bt)
    return out.reshape(B_pad)[:B].reshape(B, 1)


def init_params(key, vocab_size, embedding_dim, num_filters, filter_sizes):
    keys = jax.random.split(key, 3 + 2 * len(filter_sizes))
    params = {
        "embedding": jax.random.normal(
            keys[0], (vocab_size, embedding_dim), jnp.float32),
        "conv_w": [],
        "conv_b": [],
    }
    for i, fs in enumerate(filter_sizes):
        params["conv_w"].append(
            0.1 * jax.random.normal(
                keys[1 + 2 * i], (num_filters, 1, fs, embedding_dim),
                jnp.float32))
        params["conv_b"].append(
            0.1 * jax.random.normal(keys[2 + 2 * i], (num_filters,),
                                    jnp.float32))
    params["fc_w"] = 0.1 * jax.random.normal(
        keys[-2], (1, num_filters * len(filter_sizes)), jnp.float32)
    params["fc_b"] = 0.1 * jax.random.normal(keys[-1], (1,), jnp.float32)
    return params


def textcnn_reference(tokens, params, filter_sizes=(3, 4, 5)):
    """Pure-JAX f32 reference mirroring the PyTorch forward (inference)."""
    emb = jnp.take(params["embedding"], tokens, axis=0)        # (B, L, E)
    pooled = []
    for fs, w, bias in zip(filter_sizes, params["conv_w"], params["conv_b"]):
        B, L, E = emb.shape
        Lout = L - fs + 1
        windows = jnp.stack([emb[:, j:j + Lout, :] for j in range(fs)],
                            axis=2)                             # (B, Lout, fs, E)
        conv = jnp.einsum("btje,fje->bft", windows, w[:, 0]) + bias[None, :, None]
        conv = jnp.maximum(conv, 0.0)
        pooled.append(jnp.max(conv, axis=2))                    # (B, F)
    feats = jnp.concatenate(pooled, axis=1)                     # (B, 3F)
    return feats @ params["fc_w"].T + params["fc_b"]            # (B, 1)


if __name__ == "__main__":
    vocab_size = 50
    embedding_dim = 32
    num_filters = 16
    filter_sizes = (3, 4, 5)
    B, L = 2, 16

    key = jax.random.PRNGKey(0)
    pkey, xkey = jax.random.split(key)
    params = init_params(pkey, vocab_size, embedding_dim, num_filters,
                         filter_sizes)
    tokens = jax.random.randint(xkey, (B, L), 0, vocab_size, dtype=jnp.int32)

    out = textcnn_forward(tokens, params, filter_sizes)
    out = jax.block_until_ready(out)

    ref = jax.block_until_ready(textcnn_reference(tokens, params, filter_sizes))
    assert out.shape == (B, 1), out.shape
    # bf16 MXU inputs (f32 accumulation) -> relaxed tolerance vs f32 reference.
    np.testing.assert_allclose(np.asarray(out), np.asarray(ref),
                               rtol=5e-2, atol=5e-2)
    print("KERNEL_OK")
</pallas_src>

<mosaic_0001>
module attributes {stable_mosaic.version = 11 : i64} {
  func.func @kernel(%arg0: i32, %arg1: memref<8x24x32xbf16, #tpu.memory_space<vmem>>, %arg2: memref<5x32x128xbf16, #tpu.memory_space<vmem>>, %arg3: memref<1x128xf32, #tpu.memory_space<vmem>>, %arg4: memref<1x128xi32, #tpu.memory_space<vmem>>, %arg5: memref<1x128xf32, #tpu.memory_space<vmem>>, %arg6: memref<1x1xf32, #tpu.memory_space<smem>>, %arg7: memref<1x1x8xf32, #tpu.memory_space<vmem>>) attributes {dimension_semantics = [#tpu.dimension_semantics<parallel>], iteration_bounds = array<i64: 1>, scalar_prefetch = 0 : i64, scratch_operands = 0 : i64, tpu.core_type = #tpu.core_type<tc>, window_params = [{transform_indices = @transform_0, window_bounds = array<i64: 8, 24, 32>}, {pipeline_mode = #tpu.pipeline_mode<synchronous>, transform_indices = @transform_1, window_bounds = array<i64: 5, 32, 128>}, {pipeline_mode = #tpu.pipeline_mode<synchronous>, transform_indices = @transform_2, window_bounds = array<i64: 1, 128>}, {pipeline_mode = #tpu.pipeline_mode<synchronous>, transform_indices = @transform_3, window_bounds = array<i64: 1, 128>}, {pipeline_mode = #tpu.pipeline_mode<synchronous>, transform_indices = @transform_4, window_bounds = array<i64: 1, 128>}, {transform_indices = @transform_5, window_bounds = array<i64: 1, 1>}, {transform_indices = @transform_6, window_bounds = array<i64: 1, 1, 8>}]} {
    %cst = arith.constant 0.000000e+00 : f32
    %0 = vector.broadcast %cst : f32 to vector<128x128xf32>
    %c0 = arith.constant 0 : index
    %c0_0 = arith.constant 0 : index
    %c0_1 = arith.constant 0 : index
    %1 = vector.load %arg1[%c0, %c0_0, %c0_1] : memref<8x24x32xbf16, #tpu.memory_space<vmem>>, vector<8x16x32xbf16>
    %2 = vector.shape_cast %1 : vector<8x16x32xbf16> to vector<128x32xbf16>
    %c0_2 = arith.constant 0 : index
    %c0_3 = arith.constant 0 : index
    %c0_4 = arith.constant 0 : index
    %3 = vector.load %arg2[%c0_2, %c0_3, %c0_4] : memref<5x32x128xbf16, #tpu.memory_space<vmem>>, vector<1x32x128xbf16>
    %4 = vector.shape_cast %3 : vector<1x32x128xbf16> to vector<32x128xbf16>
    %cst_5 = arith.constant dense<0.000000e+00> : vector<128x128xf32>
    %5 = tpu.matmul %2, %4, %cst_5 {dimension_numbers = #tpu.dot_dimension_numbers<[1], [0], [0], [1], [0, 0, 1, 1], [], []>} : vector<128x32xbf16>, vector<32x128xbf16>, vector<128x128xf32> -> vector<128x128xf32>
    %6 = arith.addf %0, %5 : vector<128x128xf32>
    %c0_6 = arith.constant 0 : index
    %c1 = arith.constant 1 : index
    %c0_7 = arith.constant 0 : index
    %7 = vector.load %arg1[%c0_6, %c1, %c0_7] : memref<8x24x32xbf16, #tpu.memory_space<vmem>>, vector<8x16x32xbf16>
    %8 = vector.shape_cast %7 : vector<8x16x32xbf16> to vector<128x32xbf16>
    %c1_8 = arith.constant 1 : index
    %c0_9 = arith.constant 0 : index
    %c0_10 = arith.constant 0 : index
    %9 = vector.load %arg2[%c1_8, %c0_9, %c0_10] : memref<5x32x128xbf16, #tpu.memory_space<vmem>>, vector<1x32x128xbf16>
    %10 = vector.shape_cast %9 : vector<1x32x128xbf16> to vector<32x128xbf16>
    %cst_11 = arith.constant dense<0.000000e+00> : vector<128x128xf32>
    %11 = tpu.matmul %8, %10, %cst_11 {dimension_numbers = #tpu.dot_dimension_numbers<[1], [0], [0], [1], [0, 0, 1, 1], [], []>} : vector<128x32xbf16>, vector<32x128xbf16>, vector<128x128xf32> -> vector<128x128xf32>
    %12 = arith.addf %6, %11 : vector<128x128xf32>
    %c0_12 = arith.constant 0 : index
    %c2 = arith.constant 2 : index
    %c0_13 = arith.constant 0 : index
    %13 = vector.load %arg1[%c0_12, %c2, %c0_13] : memref<8x24x32xbf16, #tpu.memory_space<vmem>>, vector<8x16x32xbf16>
    %14 = vector.shape_cast %13 : vector<8x16x32xbf16> to vector<128x32xbf16>
    %c2_14 = arith.constant 2 : index
    %c0_15 = arith.constant 0 : index
    %c0_16 = arith.constant 0 : index
    %15 = vector.load %arg2[%c2_14, %c0_15, %c0_16] : memref<5x32x128xbf16, #tpu.memory_space<vmem>>, vector<1x32x128xbf16>
    %16 = vector.shape_cast %15 : vector<1x32x128xbf16> to vector<32x128xbf16>
    %cst_17 = arith.constant dense<0.000000e+00> : vector<128x128xf32>
    %17 = tpu.matmul %14, %16, %cst_17 {dimension_numbers = #tpu.dot_dimension_numbers<[1], [0], [0], [1], [0, 0, 1, 1], [], []>} : vector<128x32xbf16>, vector<32x128xbf16>, vector<128x128xf32> -> vector<128x128xf32>
    %18 = arith.addf %12, %17 : vector<128x128xf32>
    %c0_18 = arith.constant 0 : index
    %c3 = arith.constant 3 : index
    %c0_19 = arith.constant 0 : index
    %19 = vector.load %arg1[%c0_18, %c3, %c0_19] : memref<8x24x32xbf16, #tpu.memory_space<vmem>>, vector<8x16x32xbf16>
    %20 = vector.shape_cast %19 : vector<8x16x32xbf16> to vector<128x32xbf16>
    %c3_20 = arith.constant 3 : index
    %c0_21 = arith.constant 0 : index
    %c0_22 = arith.constant 0 : index
    %21 = vector.load %arg2[%c3_20, %c0_21, %c0_22] : memref<5x32x128xbf16, #tpu.memory_space<vmem>>, vector<1x32x128xbf16>
    %22 = vector.shape_cast %21 : vector<1x32x128xbf16> to vector<32x128xbf16>
    %cst_23 = arith.constant dense<0.000000e+00> : vector<128x128xf32>
    %23 = tpu.matmul %20, %22, %cst_23 {dimension_numbers = #tpu.dot_dimension_numbers<[1], [0], [0], [1], [0, 0, 1, 1], [], []>} : vector<128x32xbf16>, vector<32x128xbf16>, vector<128x128xf32> -> vector<128x128xf32>
    %24 = arith.addf %18, %23 : vector<128x128xf32>
    %c0_24 = arith.constant 0 : index
    %c4 = arith.constant 4 : index
    %c0_25 = arith.constant 0 : index
    %25 = vector.load %arg1[%c0_24, %c4, %c0_25] : memref<8x24x32xbf16, #tpu.memory_space<vmem>>, vector<8x16x32xbf16>
    %26 = vector.shape_cast %25 : vector<8x16x32xbf16> to vector<128x32xbf16>
    %c4_26 = arith.constant 4 : index
    %c0_27 = arith.constant 0 : index
    %c0_28 = arith.constant 0 : index
    %27 = vector.load %arg2[%c4_26, %c0_27, %c0_28] : memref<5x32x128xbf16, #tpu.memory_space<vmem>>, vector<1x32x128xbf16>
    %28 = vector.shape_cast %27 : vector<1x32x128xbf16> to vector<32x128xbf16>
    %cst_29 = arith.constant dense<0.000000e+00> : vector<128x128xf32>
    %29 = tpu.matmul %26, %28, %cst_29 {dimension_numbers = #tpu.dot_dimension_numbers<[1], [0], [0], [1], [0, 0, 1, 1], [], []>} : vector<128x32xbf16>, vector<32x128xbf16>, vector<128x128xf32> -> vector<128x128xf32>
    %30 = arith.addf %24, %29 : vector<128x128xf32>
    %c0_30 = arith.constant 0 : index
    %c0_31 = arith.constant 0 : index
    %31 = vector.load %arg3[%c0_30, %c0_31] : memref<1x128xf32, #tpu.memory_space<vmem>>, vector<1x128xf32>
    %32 = vector.broadcast %31 : vector<1x128xf32> to vector<128x128xf32>
    %33 = arith.addf %30, %32 : vector<128x128xf32>
    %cst_32 = arith.constant 0.000000e+00 : f32
    %34 = vector.broadcast %cst_32 : f32 to vector<128x128xf32>
    %35 = arith.maximumf %33, %34 : vector<128x128xf32>
    %36 = tpu.iota {dimensions = array<i32: 0>} : vector<16x128xi32>
    %c0_33 = arith.constant 0 : index
    %c0_34 = arith.constant 0 : index
    %37 = vector.load %arg4[%c0_33, %c0_34] : memref<1x128xi32, #tpu.memory_space<vmem>>, vector<1x128xi32>
    %38 = vector.broadcast %37 : vector<1x128xi32> to vector<16x128xi32>
    %39 = arith.cmpi slt, %36, %38 : vector<16x128xi32>
    %40 = arith.extui %39 : vector<16x128xi1> to vector<16x128xi32>
    %41 = arith.sitofp %40 : vector<16x128xi32> to vector<16x128xf32>
    %42 = vector.shape_cast %35 : vector<128x128xf32> to vector<8x16x128xf32>
    %43 = vector.shape_cast %41 : vector<16x128xf32> to vector<1x16x128xf32>
    %44 = vector.broadcast %43 : vector<1x16x128xf32> to vector<8x16x128xf32>
    %45 = arith.mulf %42, %44 : vector<8x16x128xf32>
    %cst_35 = arith.constant dense<0xFF800000> : vector<8x128xf32>
    %46 = vector.multi_reduction <maximumf>, %45, %cst_35 [1] : vector<8x16x128xf32> to vector<8x128xf32>
    %c0_36 = arith.constant 0 : index
    %c0_37 = arith.constant 0 : index
    %47 = vector.load %arg5[%c0_36, %c0_37] : memref<1x128xf32, #tpu.memory_space<vmem>>, vector<1x128xf32>
    %cst_38 = arith.constant dense<0.000000e+00> : vector<1x8xf32>
    %48 = tpu.matmul %47, %46, %cst_38 {dimension_numbers = #tpu.dot_dimension_numbers<[1], [1], [0], [0], [0, 0, 1, 0], [], []>} : vector<1x128xf32>, vector<8x128xf32>, vector<1x8xf32> -> vector<1x8xf32>
    %c0_39 = arith.constant 0 : index
    %c0_40 = arith.constant 0 : index
    %49 = memref.load %arg6[%c0_39, %c0_40] : memref<1x1xf32, #tpu.memory_space<smem>>
    %50 = vector.broadcast %49 : f32 to vector<1x8xf32>
    %51 = arith.addf %48, %50 : vector<1x8xf32>
    %52 = vector.shape_cast %51 : vector<1x8xf32> to vector<1x1x8xf32>
    %c0_41 = arith.constant 0 : index
    %c0_42 = arith.constant 0 : index
    %c0_43 = arith.constant 0 : index
    %53 = vector.load %arg7[%c0_41, %c0_42, %c0_43] : memref<1x1x8xf32, #tpu.memory_space<vmem>>, vector<1x1x8xf32>
    tpu.vector_store %arg7[%c0_41, %c0_42, %c0_43], %52 {strides = array<i32>} : memref<1x1x8xf32, #tpu.memory_space<vmem>>, vector<1x1x8xf32>,
    return
  }
  func.func @transform_0(%arg0: i32) -> (i32, i32, i32) {
    %c0_i32 = arith.constant 0 : i32
    %c0_i32_0 = arith.constant 0 : i32
    %c0_i32_1 = arith.constant 0 : i32
    return %arg0, %c0_i32, %c0_i32_0 : i32, i32, i32
  }
  func.func @transform_1(%arg0: i32) -> (i32, i32, i32) {
    %c0_i32 = arith.constant 0 : i32
    %c0_i32_0 = arith.constant 0 : i32
    %c0_i32_1 = arith.constant 0 : i32
    %c0_i32_2 = arith.constant 0 : i32
    return %c0_i32, %c0_i32_0, %c0_i32_1 : i32, i32, i32
  }
  func.func @transform_2(%arg0: i32) -> (i32, i32) {
    %c0_i32 = arith.constant 0 : i32
    %c0_i32_0 = arith.constant 0 : i32
    %c0_i32_1 = arith.constant 0 : i32
    return %c0_i32, %c0_i32_0 : i32, i32
  }
  func.func @transform_3(%arg0: i32) -> (i32, i32) {
    %c0_i32 = arith.constant 0 : i32
    %c0_i32_0 = arith.constant 0 : i32
    %c0_i32_1 = arith.constant 0 : i32
    return %c0_i32, %c0_i32_0 : i32, i32
  }
  func.func @transform_4(%arg0: i32) -> (i32, i32) {
    %c0_i32 = arith.constant 0 : i32
    %c0_i32_0 = arith.constant 0 : i32
    %c0_i32_1 = arith.constant 0 : i32
    return %c0_i32, %c0_i32_0 : i32, i32
  }
  func.func @transform_5(%arg0: i32) -> (i32, i32) {
    %c0_i32 = arith.constant 0 : i32
    %c0_i32_0 = arith.constant 0 : i32
    %c0_i32_1 = arith.constant 0 : i32
    return %c0_i32, %c0_i32_0 : i32, i32
  }
  func.func @transform_6(%arg0: i32) -> (i32, i32, i32) {
    %c0_i32 = arith.constant 0 : i32
    %c0_i32_0 = arith.constant 0 : i32
    %c0_i32_1 = arith.constant 0 : i32
    return %arg0, %c0_i32, %c0_i32_0 : i32, i32, i32
  }
}

</mosaic_0001>

<llo_original>
// kernel: tpu_custom_call.1
$region0: #{tpu_custom_call.1}
  #allocation0 [shape = 'u32[]', space=smem, size = 0x4, offset = 0x4, fixed_abs, tag = 'smem constant byte address 0x4 - core index']
  #allocation1 [shape = 'u32[144,128]{1,0:T(1,128)}', space=vmem, size = 0x12000, scoped, tag = 'internal scratch']
  #allocation2 [shape = 'f32[1,1]{1,0:T(1,128)S(6)}', space=smem, size = 0x200, scoped, tag = 'scoped memory for tpu_custom_call.1']
  %s0 = inlined_call_operand.hbm [shape: bf16[8,24,32], index: 0, kind: input, shape index: {}]
  %s1 = inlined_call_operand.hbm [shape: bf16[5,32,128], index: 1, kind: input, shape index: {}]
  %s2 = inlined_call_operand.vmem [shape: f32[1,128], index: 2, kind: input, shape index: {}]
  %s3 = inlined_call_operand.vmem [shape: s32[1,128], index: 3, kind: input, shape index: {}]
  %s4 = inlined_call_operand.vmem [shape: f32[1,128], index: 4, kind: input, shape index: {}]
  %s5 = inlined_call_operand.<no memory space> [shape: f32[1,1], index: 5, kind: input, shape index: {}]
  %s6 = inlined_call_operand.hbm [shape: f32[1,1,8], index: 6, kind: output, shape index: {}]
  %s7 = sld [smem:[#allocation0]]
  $region42: #{tpu_custom_call.1} parent=0
    _
  %s9 = ssub.s32 1, %s7
  %s10 = scalar_select 0, %s9, %s7
  %11 = sst [smem:[#allocation2]] %s5
  $region1: #{tpu_custom_call.1} parent=0
    #allocation3 [shape = 'u8[49152]{0}', space=vmem, size = 0xc000, scoped, tag = 'input window, operand 0, single buffered']
    #allocation4 [shape = 's32[1]{0}', space=sflag, size = 0x4, scoped, tag = 'scoped memory for tpu_custom_call.1']
    #allocation5 [shape = 's32[1]{0}', space=sflag, size = 0x4, scoped, tag = 'scoped memory for tpu_custom_call.1']
    #allocation6 [shape = 'u8[40960]{0}', space=vmem, size = 0xa000, scoped, tag = 'input window, operand 1, single buffered']
    #allocation7 [shape = 's32[1]{0}', space=sflag, size = 0x4, scoped, tag = 'scoped memory for tpu_custom_call.1']
    #allocation8 [shape = 'u8[512]{0}', space=vmem, size = 0x400, scoped, tag = 'output window, operand 0, single buffered']
    %12 = vsyncpa [#allocation4], 0
    %13 = vsyncpa [#allocation7], 0
    %14 = vsyncpa [#allocation5], 0
    // Predicated region
    $region2: #{tpu_custom_call.1} parent=1 // pred_check
      _
    $region3: #{tpu_custom_call.1} parent=1 // pred_check_branch
      %16 = sbr.rel (0) target = $region5
    $region4: #{tpu_custom_call.1} parent=1 // pred_region
      %s18 = ssub.s32 1536, 1536
      %19 = vsyncadd [#allocation4], %s18
      %s20 = sshll.u32 [#allocation3], 4
      %s21 = int_to_ptr.vmem [resolvable:$true] %s20
      %26 = dma.hbm_to_vmem [thread:$0]  %s0, 1536, %s21, [#allocation4], 64, 64, 4
    $region5: #{tpu_custom_call.1} parent=1 // pred_fallthru
      _
    // Predicated region
    $region6: #{tpu_custom_call.1} parent=1 // pred_check
      _
    $region7: #{tpu_custom_call.1} parent=1 // pred_check_branch
      %28 = sbr.rel (0) target = $region9
    $region8: #{tpu_custom_call.1} parent=1 // pred_region
      %s30 = ssub.s32 1280, 1280
      %31 = vsyncadd [#allocation7], %s30
      %s32 = sshll.u32 [#allocation6], 4
      %s33 = int_to_ptr.vmem [resolvable:$true] %s32
      %38 = dma.hbm_to_vmem [thread:$0]  %s1, 1280, %s33, [#allocation7], 64, 64, 4
    $region9: #{tpu_custom_call.1} parent=1 // pred_fallthru
      _
    // Predicated region
    $region10: #{tpu_custom_call.1} parent=1 // pred_check
      _
    $region11: #{tpu_custom_call.1} parent=1 // pred_check_branch
      %40 = sbr.rel (0) target = $region13
    $region12: #{tpu_custom_call.1} parent=1 // pred_region
      _
    $region13: #{tpu_custom_call.1} parent=1 // pred_fallthru
      _
    // Predicated region
    $region14: #{tpu_custom_call.1} parent=1 // pred_check
      _
    $region15: #{tpu_custom_call.1} parent=1 // pred_check_branch
      %42 = sbr.rel (0) target = $region17
    $region16: #{tpu_custom_call.1} parent=1 // pred_region
      _
    $region17: #{tpu_custom_call.1} parent=1 // pred_fallthru
      _
    // Predicated region
    $region18: #{tpu_custom_call.1} parent=1 // pred_check
      _
    $region19: #{tpu_custom_call.1} parent=1 // pred_check_branch
      %44 = sbr.rel (0) target = $region21
    $region20: #{tpu_custom_call.1} parent=1 // pred_region
      _
    $region21: #{tpu_custom_call.1} parent=1 // pred_fallthru
      _
    // Predicated region
    $region22: #{tpu_custom_call.1} parent=1 // pred_check
      _
    $region23: #{tpu_custom_call.1} parent=1 // pred_check_branch
      %46 = sbr.rel (0) target = $region25
    $region24: #{tpu_custom_call.1} parent=1 // pred_region
      _
    $region25: #{tpu_custom_call.1} parent=1 // pred_fallthru
      _
    // Predicated region
    $region26: #{tpu_custom_call.1} parent=1 // pred_check
      _
    $region27: #{tpu_custom_call.1} parent=1 // pred_check_branch
      %48 = sbr.rel (0) target = $region29
    $region28: #{tpu_custom_call.1} parent=1 // pred_region
      %49 = dma.done [#allocation4], 1536
    $region29: #{tpu_custom_call.1} parent=1 // pred_fallthru
      _
    // Predicated region
    $region30: #{tpu_custom_call.1} parent=1 // pred_check
      _
    $region31: #{tpu_custom_call.1} parent=1 // pred_check_branch
      %51 = sbr.rel (0) target = $region33
    $region32: #{tpu_custom_call.1} parent=1 // pred_region
      %52 = dma.done [#allocation7], 1280
    $region33: #{tpu_custom_call.1} parent=1 // pred_fallthru
      _
    %v54 = vld [vmem:[#allocation3] sm:$0xf]
    %v55 = vld [vmem:[#allocation3 + $0x4] sm:$0xf]
    %v56 = vld [vmem:[#allocation3 + $0xc] sm:$0xf]
    %v57 = vld [vmem:[#allocation3 + $0x10] sm:$0xf]
    %v58 = vld [vmem:[#allocation3 + $0x18] sm:$0xf]
    %v59 = vld [vmem:[#allocation3 + $0x1c] sm:$0xf]
    %v60 = vld [vmem:[#allocation3 + $0x24] sm:$0xf]
    %v61 = vld [vmem:[#allocation3 + $0x28] sm:$0xf]
    %v62 = vld [vmem:[#allocation3 + $0x30] sm:$0xf]
    %v63 = vld [vmem:[#allocation3 + $0x34] sm:$0xf]
    %v64 = vld [vmem:[#allocation3 + $0x3c] sm:$0xf]
    %v65 = vld [vmem:[#allocation3 + $0x40] sm:$0xf]
    %v66 = vld [vmem:[#allocation3 + $0x48] sm:$0xf]
    %v67 = vld [vmem:[#allocation3 + $0x4c] sm:$0xf]
    %v68 = vld [vmem:[#allocation3 + $0x54] sm:$0xf]
    %v69 = vld [vmem:[#allocation3 + $0x58] sm:$0xf]
    %v70 = vld [vmem:[#allocation6] sm:$0xf]
    %v71 = vld [vmem:[#allocation6 + $0x4] sm:$0xf]
    %v72 = vld [vmem:[#allocation6 + $0x8] sm:$0xf]
    %v73 = vld [vmem:[#allocation6 + $0xc] sm:$0xf]
    %v74 = vld [vmem:[#allocation3 + $0x8] sm:$0x1]
    %v75 = vld [vmem:[#allocation3 + $0x14] sm:$0x1]
    %v76 = vld [vmem:[#allocation3 + $0x20] sm:$0x1]
    %v77 = vld [vmem:[#allocation3 + $0x2c] sm:$0x1]
    %v78 = vld [vmem:[#allocation3 + $0x38] sm:$0x1]
    %v79 = vld [vmem:[#allocation3 + $0x44] sm:$0x1]
    %v80 = vld [vmem:[#allocation3 + $0x50] sm:$0x1]
    %v81 = vld [vmem:[#allocation3 + $0x5c] sm:$0x1]
    %vm82 = vsmask.f32 3328
    %vm83 = vsmask.f32 7440
    %vm84 = vmor %vm82, %vm83
    %v86 = vshrl.u32 %v54, 16
    %v88 = vrot.slane %v86, 4
    %v89 = vshll.u32 %v54, 16
    %v91 = vrot.slane %v89, 5
    %v92 = vor.u32 %v88, %v91
    %v93 = vrot.slane %v92, 4
    %v95 = vshll.u32 %v55, 16
    %v97 = vrot.slane %v95, 5
    %v98 = vsel %vm84, %v93, %v97
    %v99 = vshrl.u32 %v55, 16
    %v101 = vrot.slane %v99, 4
    %v102 = vor.u32 %v101, %v97
    %v103 = vrot.slane %v102, 4
    %v105 = vshll.u32 %v74, 16
    %v107 = vrot.slane %v105, 5
    %v108 = vsel %vm84, %v103, %v107
    %v110 = vshrl.u32 %v56, 16
    %v112 = vrot.slane %v110, 4
    %v113 = vshll.u32 %v56, 16
    %v115 = vrot.slane %v113, 5
    %v116 = vor.u32 %v112, %v115
    %v117 = vrot.slane %v116, 4
    %v119 = vshll.u32 %v57, 16
    %v121 = vrot.slane %v119, 5
    %v122 = vsel %vm84, %v117, %v121
    %v123 = vshrl.u32 %v57, 16
    %v125 = vrot.slane %v123, 4
    %v126 = vor.u32 %v125, %v121
    %v127 = vrot.slane %v126, 4
    %v129 = vshll.u32 %v75, 16
    %v131 = vrot.slane %v129, 5
    %v132 = vsel %vm84, %v127, %v131
    %v134 = vshrl.u32 %v58, 16
    %v136 = vrot.slane %v134, 4
    %v137 = vshll.u32 %v58, 16
    %v139 = vrot.slane %v137, 5
    %v140 = vor.u32 %v136, %v139
    %v141 = vrot.slane %v140, 4
    %v143 = vshll.u32 %v59, 16
    %v145 = vrot.slane %v143, 5
    %v146 = vsel %vm84, %v141, %v145
    %v147 = vshrl.u32 %v59, 16
    %v149 = vrot.slane %v147, 4
    %v150 = vor.u32 %v149, %v145
    %v151 = vrot.slane %v150, 4
    %v153 = vshll.u32 %v76, 16
    %v155 = vrot.slane %v153, 5
    %v156 = vsel %vm84, %v151, %v155
    %v158 = vshrl.u32 %v60, 16
    %v160 = vrot.slane %v158, 4
    %v161 = vshll.u32 %v60, 16
    %v163 = vrot.slane %v161, 5
    %v164 = vor.u32 %v160, %v163
    %v165 = vrot.slane %v164, 4
    %v167 = vshll.u32 %v61, 16
    %v169 = vrot.slane %v167, 5
    %v170 = vsel %vm84, %v165, %v169
    %v171 = vshrl.u32 %v61, 16
    %v173 = vrot.slane %v171, 4
    %v174 = vor.u32 %v173, %v169
    %v175 = vrot.slane %v174, 4
    %v177 = vshll.u32 %v77, 16
    %v179 = vrot.slane %v177, 5
    %v180 = vsel %vm84, %v175, %v179
    %v182 = vshrl.u32 %v62, 16
    %v184 = vrot.slane %v182, 4
    %v185 = vshll.u32 %v62, 16
    %v187 = vrot.slane %v185, 5
    %v188 = vor.u32 %v184, %v187
    %v189 = vrot.slane %v188, 4
    %v191 = vshll.u32 %v63, 16
    %v193 = vrot.slane %v191, 5
    %v194 = vsel %vm84, %v189, %v193
    %v195 = vshrl.u32 %v63, 16
    %v197 = vrot.slane %v195, 4
    %v198 = vor.u32 %v197, %v193
    %v199 = vrot.slane %v198, 4
    %v201 = vshll.u32 %v78, 16
    %v203 = vrot.slane %v201, 5
    %v204 = vsel %vm84, %v199, %v203
    %v206 = vshrl.u32 %v64, 16
    %v208 = vrot.slane %v206, 4
    %v209 = vshll.u32 %v64, 16
    %v211 = vrot.slane %v209, 5
    %v212 = vor.u32 %v208, %v211
    %v213 = vrot.slane %v212, 4
    %v215 = vshll.u32 %v65, 16
    %v217 = vrot.slane %v215, 5
    %v218 = vsel %vm84, %v213, %v217
    %v219 = vshrl.u32 %v65, 16
    %v221 = vrot.slane %v219, 4
    %v222 = vor.u32 %v221, %v217
    %v223 = vrot.slane %v222, 4
    %v225 = vshll.u32 %v79, 16
    %v227 = vrot.slane %v225, 5
    %v228 = vsel %vm84, %v223, %v227
    %v230 = vshrl.u32 %v66, 16
    %v232 = vrot.slane %v230, 4
    %v233 = vshll.u32 %v66, 16
    %v235 = vrot.slane %v233, 5
    %v236 = vor.u32 %v232, %v235
    %v237 = vrot.slane %v236, 4
    %v239 = vshll.u32 %v67, 16
    %v241 = vrot.slane %v239, 5
    %v242 = vsel %vm84, %v237, %v241
    %v243 = vshrl.u32 %v67, 16
    %v245 = vrot.slane %v243, 4
    %v246 = vor.u32 %v245, %v241
    %v247 = vrot.slane %v246, 4
    %v249 = vshll.u32 %v80, 16
    %v251 = vrot.slane %v249, 5
    %v252 = vsel %vm84, %v247, %v251
    %v254 = vshrl.u32 %v68, 16
    %v256 = vrot.slane %v254, 4
    %v257 = vshll.u32 %v68, 16
    %v259 = vrot.slane %v257, 5
    %v260 = vor.u32 %v256, %v259
    %v261 = vrot.slane %v260, 4
    %v263 = vshll.u32 %v69, 16
    %v265 = vrot.slane %v263, 5
    %v266 = vsel %vm84, %v261, %v265
    %v267 = vshrl.u32 %v69, 16
    %v269 = vrot.slane %v267, 4
    %v270 = vor.u32 %v269, %v265
    %v271 = vrot.slane %v270, 4
    %v273 = vshll.u32 %v81, 16
    %v275 = vrot.slane %v273, 5
    %v276 = vsel %vm84, %v271, %v275
    %s277 = scalar_lea.vmem [#allocation6], 16
    %v278 = vld [vmem:[%s277] sm:$0xf]
    %v279 = vld [vmem:[%s277 + $0x4] sm:$0xf]
    %v280 = vld [vmem:[%s277 + $0x8] sm:$0xf]
    %v281 = vld [vmem:[%s277 + $0xc] sm:$0xf]
    %v282 = vunpack.c.l.b16 %v98
    %v283 = vunpack.c.l.b16 %v108
    %v284 = vunpack.c.l.b16 %v122
    %v285 = vunpack.c.l.b16 %v132
    %v286 = vunpack.c.l.b16 %v146
    %v287 = vunpack.c.l.b16 %v156
    %v288 = vunpack.c.l.b16 %v170
    %v289 = vunpack.c.l.b16 %v180
    %v290 = vunpack.c.l.b16 %v194
    %v291 = vunpack.c.l.b16 %v204
    %v292 = vunpack.c.l.b16 %v218
    %v293 = vunpack.c.l.b16 %v228
    %v294 = vunpack.c.l.b16 %v242
    %v295 = vunpack.c.l.b16 %v252
    %v296 = vunpack.c.l.b16 %v266
    %v297 = vunpack.c.l.b16 %v276
    %v298 = vpack.c.b16 %v283, %v282
    %v299 = vpack.c.b16 %v285, %v284
    %v300 = vpack.c.b16 %v287, %v286
    %v301 = vpack.c.b16 %v289, %v288
    %v302 = vpack.c.b16 %v291, %v290
    %v303 = vpack.c.b16 %v293, %v292
    %v304 = vpack.c.b16 %v295, %v294
    %v305 = vpack.c.b16 %v297, %v296
    %v310 = vunpack.c.l.b16 %v278
    %v311 = vunpack.c.l.b16 %v279
    %v312 = vunpack.c.l.b16 %v280
    %v313 = vunpack.c.l.b16 %v281
    %v314 = vpack.c.b16 %v311, %v310
    %v315 = vpack.c.b16 %v313, %v312
    %vm318 = vcmask 261120
    %v320 = vsel %vm318, %v298, 0
    %v323 = vsel %vm318, %v299, 0
    %v326 = vsel %vm318, %v300, 0
    %v329 = vsel %vm318, %v301, 0
    %v332 = vsel %vm318, %v302, 0
    %v335 = vsel %vm318, %v303, 0
    %v338 = vsel %vm318, %v304, 0
    %v341 = vsel %vm318, %v305, 0
    %343 = vmatprep.subr.bf16.mxu0 0
    %344 = vmatpush1.bf16.msra.mxu0 %v314
    %345 = vmatprep.subr.bf16.mxu0 0
    %346 = vmatpush1.bf16.msra.mxu0 %v315
    %347 = vmatprep.subr.bf16.mxu0 0
    %348 = vmatpush1.bf16.msra.mxu0 0
    %349 = vmatprep.subr.bf16.mxu0 0
    %350 = vmatpush1.bf16.msra.mxu0 0
    %351 = vmatprep.subr.bf16.mxu0 0
    %352 = vmatpush1.bf16.msra.mxu0 0
    %353 = vmatprep.subr.bf16.mxu0 0
    %354 = vmatpush1.bf16.msra.mxu0 0
    %355 = vmatprep.subr.bf16.mxu0 0
    %356 = vmatpush1.bf16.msra.mxu0 0
    %357 = vmatprep.subr.bf16.mxu0 0
    %358 = vmatpush1.bf16.msra.mxu0 0
    %359 = vmatprep.subr.bf16.mxu0 0
    %360 = vmatpush1.bf16.msra.mxu0 0
    %361 = vmatprep.subr.bf16.mxu0 0
    %362 = vmatpush1.bf16.msra.mxu0 0
    %363 = vmatprep.subr.bf16.mxu0 0
    %364 = vmatpush1.bf16.msra.mxu0 0
    %365 = vmatprep.subr.bf16.mxu0 0
    %366 = vmatpush1.bf16.msra.mxu0 0
    %367 = vmatprep.subr.bf16.mxu0 0
    %368 = vmatpush1.bf16.msra.mxu0 0
    %369 = vmatprep.subr.bf16.mxu0 0
    %370 = vmatpush1.bf16.msra.mxu0 0
    %371 = vmatprep.subr.bf16.mxu0 0
    %372 = vmatpush1.bf16.msra.mxu0 0
    %373 = vmatprep.subr.bf16.mxu0 0
    %374 = vmatpush1.bf16.msra.mxu0 0
    %375 = vmatprep.mubr.bf16.mxu0 0
    %376 = vmatmul.mubr.bf16.gmra.mrb[0].mxu0 %v320
    %v377 = vpop.f32.mrb[0].mxu0
    %v378 = vadd.f32 0.0, %v377
    %v379 = vpop.f32.mrb[0].mxu0
    %v380 = vpop.f32.mrb[0].mxu0
    %v381 = vadd.f32 0.0, %v380
    %v382 = vpop.f32.mrb[0].mxu0
    %383 = vmatprep.mubr.bf16.mxu0 0
    %384 = vmatmul.mubr.bf16.gmra.mrb[0].mxu0 %v323
    %v385 = vpop.f32.mrb[0].mxu0
    %v386 = vadd.f32 0.0, %v385
    %v387 = vpop.f32.mrb[0].mxu0
    %v388 = vpop.f32.mrb[0].mxu0
    %v389 = vadd.f32 0.0, %v388
    %v390 = vpop.f32.mrb[0].mxu0
    %391 = vmatprep.mubr.bf16.mxu0 0
    %392 = vmatmul.mubr.bf16.gmra.mrb[0].mxu0 %v326
    %v393 = vpop.f32.mrb[0].mxu0
    %v394 = vadd.f32 0.0, %v393
    %v395 = vpop.f32.mrb[0].mxu0
    %v396 = vpop.f32.mrb[0].mxu0
    %v397 = vadd.f32 0.0, %v396
    %v398 = vpop.f32.mrb[0].mxu0
    %399 = vmatprep.mubr.bf16.mxu0 0
    %400 = vmatmul.mubr.bf16.gmra.mrb[0].mxu0 %v329
    %v401 = vpop.f32.mrb[0].mxu0
    %v402 = vadd.f32 0.0, %v401
    %v403 = vpop.f32.mrb[0].mxu0
    %v404 = vpop.f32.mrb[0].mxu0
    %v405 = vadd.f32 0.0, %v404
    %v406 = vpop.f32.mrb[0].mxu0
    %407 = vmatprep.mubr.bf16.mxu0 0
    %408 = vmatmul.mubr.bf16.gmra.mrb[0].mxu0 %v332
    %v409 = vpop.f32.mrb[0].mxu0
    %v410 = vadd.f32 0.0, %v409
    %v411 = vpop.f32.mrb[0].mxu0
    %v412 = vpop.f32.mrb[0].mxu0
    %v413 = vadd.f32 0.0, %v412
    %v414 = vpop.f32.mrb[0].mxu0
    %415 = vmatprep.mubr.bf16.mxu0 0
    %416 = vmatmul.mubr.bf16.gmra.mrb[0].mxu0 %v335
    %v417 = vpop.f32.mrb[0].mxu0
    %v418 = vadd.f32 0.0, %v417
    %v419 = vpop.f32.mrb[0].mxu0
    %v420 = vpop.f32.mrb[0].mxu0
    %v421 = vadd.f32 0.0, %v420
    %v422 = vpop.f32.mrb[0].mxu0
    %423 = vmatprep.mubr.bf16.mxu0 0
    %424 = vmatmul.mubr.bf16.gmra.mrb[0].mxu0 %v338
    %v425 = vpop.f32.mrb[0].mxu0
    %v426 = vadd.f32 0.0, %v425
    %v427 = vpop.f32.mrb[0].mxu0
    %v428 = vpop.f32.mrb[0].mxu0
    %v429 = vadd.f32 0.0, %v428
    %v430 = vpop.f32.mrb[0].mxu0
    %431 = vmatprep.mubr.bf16.mxu0 0
    %432 = vmatmul.mubr.bf16.gmra.mrb[0].mxu0 %v341
    %v433 = vpop.f32.mrb[0].mxu0
    %v434 = vadd.f32 0.0, %v433
    %v435 = vpop.f32.mrb[0].mxu0
    %v436 = vpop.f32.mrb[0].mxu0
    %v437 = vadd.f32 0.0, %v436
    %v438 = vpop.f32.mrb[0].mxu0
    %439 = vdwg.mxu0
    %v456 = vunpack.c.l.b16 %v54
    %v457 = vunpack.c.l.b16 %v55
    %v458 = vunpack.c.l.b16 %v56
    %v459 = vunpack.c.l.b16 %v57
    %v460 = vunpack.c.l.b16 %v58
    %v461 = vunpack.c.l.b16 %v59
    %v462 = vunpack.c.l.b16 %v60
    %v463 = vunpack.c.l.b16 %v61
    %v464 = vunpack.c.l.b16 %v62
    %v465 = vunpack.c.l.b16 %v63
    %v466 = vunpack.c.l.b16 %v64
    %v467 = vunpack.c.l.b16 %v65
    %v468 = vunpack.c.l.b16 %v66
    %v469 = vunpack.c.l.b16 %v67
    %v470 = vunpack.c.l.b16 %v68
    %v471 = vunpack.c.l.b16 %v69
    %v472 = vpack.c.b16 %v457, %v456
    %v473 = vpack.c.b16 %v459, %v458
    %v474 = vpack.c.b16 %v461, %v460
    %v475 = vpack.c.b16 %v463, %v462
    %v476 = vpack.c.b16 %v465, %v464
    %v477 = vpack.c.b16 %v467, %v466
    %v478 = vpack.c.b16 %v469, %v468
    %v479 = vpack.c.b16 %v471, %v470
    %v484 = vunpack.c.l.b16 %v70
    %v485 = vunpack.c.l.b16 %v71
    %v486 = vunpack.c.l.b16 %v72
    %v487 = vunpack.c.l.b16 %v73
    %v488 = vpack.c.b16 %v485, %v484
    %v489 = vpack.c.b16 %v487, %v486
    %v493 = vsel %vm318, %v472, 0
    %v496 = vsel %vm318, %v473, 0
    %v499 = vsel %vm318, %v474, 0
    %v502 = vsel %vm318, %v475, 0
    %v505 = vsel %vm318, %v476, 0
    %v508 = vsel %vm318, %v477, 0
    %v511 = vsel %vm318, %v478, 0
    %v514 = vsel %vm318, %v479, 0
    %516 = vmatprep.subr.bf16.mxu0 0
    %517 = vmatpush1.bf16.msra.mxu0 %v488
    %518 = vmatprep.subr.bf16.mxu0 0
    %519 = vmatpush1.bf16.msra.mxu0 %v489
    %520 = vmatprep.subr.bf16.mxu0 0
    %521 = vmatpush1.bf16.msra.mxu0 0
    %522 = vmatprep.subr.bf16.mxu0 0
    %523 = vmatpush1.bf16.msra.mxu0 0
    %524 = vmatprep.subr.bf16.mxu0 0
    %525 = vmatpush1.bf16.msra.mxu0 0
    %526 = vmatprep.subr.bf16.mxu0 0
    %527 = vmatpush1.bf16.msra.mxu0 0
    %528 = vmatprep.subr.bf16.mxu0 0
    %529 = vmatpush1.bf16.msra.mxu0 0
    %530 = vmatprep.subr.bf16.mxu0 0
    %531 = vmatpush1.bf16.msra.mxu0 0
    %532 = vmatprep.subr.bf16.mxu0 0
    %533 = vmatpush1.bf16.msra.mxu0 0
    %534 = vmatprep.subr.bf16.mxu0 0
    %535 = vmatpush1.bf16.msra.mxu0 0
    %536 = vmatprep.subr.bf16.mxu0 0
    %537 = vmatpush1.bf16.msra.mxu0 0
    %538 = vmatprep.subr.bf16.mxu0 0
    %539 = vmatpush1.bf16.msra.mxu0 0
    %540 = vmatprep.subr.bf16.mxu0 0
    %541 = vmatpush1.bf16.msra.mxu0 0
    %542 = vmatprep.subr.bf16.mxu0 0
    %543 = vmatpush1.bf16.msra.mxu0 0
    %544 = vmatprep.subr.bf16.mxu0 0
    %545 = vmatpush1.bf16.msra.mxu0 0
    %546 = vmatprep.subr.bf16.mxu0 0
    %547 = vmatpush1.bf16.msra.mxu0 0
    %548 = vmatprep.mubr.bf16.mxu0 0
    %549 = vmatmul.mubr.bf16.gmra.mrb[0].mxu0 %v493
    %v550 = vpop.f32.mrb[0].mxu0
    %v551 = vadd.f32 %v378, %v550
    %v552 = vpop.f32.mrb[0].mxu0
    %v553 = vpop.f32.mrb[0].mxu0
    %v554 = vadd.f32 %v381, %v553
    %v555 = vpop.f32.mrb[0].mxu0
    %556 = vmatprep.mubr.bf16.mxu0 0
    %557 = vmatmul.mubr.bf16.gmra.mrb[0].mxu0 %v496
    %v558 = vpop.f32.mrb[0].mxu0
    %v559 = vadd.f32 %v386, %v558
    %v560 = vpop.f32.mrb[0].mxu0
    %v561 = vpop.f32.mrb[0].mxu0
    %v562 = vadd.f32 %v389, %v561
    %v563 = vpop.f32.mrb[0].mxu0
    %564 = vmatprep.mubr.bf16.mxu0 0
    %565 = vmatmul.mubr.bf16.gmra.mrb[0].mxu0 %v499
    %v566 = vpop.f32.mrb[0].mxu0
    %v567 = vadd.f32 %v394, %v566
    %v568 = vpop.f32.mrb[0].mxu0
    %v569 = vpop.f32.mrb[0].mxu0
    %v570 = vadd.f32 %v397, %v569
    %v571 = vpop.f32.mrb[0].mxu0
    %572 = vmatprep.mubr.bf16.mxu0 0
    %573 = vmatmul.mubr.bf16.gmra.mrb[0].mxu0 %v502
    %v574 = vpop.f32.mrb[0].mxu0
    %v575 = vadd.f32 %v402, %v574
    %v576 = vpop.f32.mrb[0].mxu0
    %v577 = vpop.f32.mrb[0].mxu0
    %v578 = vadd.f32 %v405, %v577
    %v579 = vpop.f32.mrb[0].mxu0
    %580 = vmatprep.mubr.bf16.mxu0 0
    %581 = vmatmul.mubr.bf16.gmra.mrb[0].mxu0 %v505
    %v582 = vpop.f32.mrb[0].mxu0
    %v583 = vadd.f32 %v410, %v582
    %v584 = vpop.f32.mrb[0].mxu0
    %v585 = vpop.f32.mrb[0].mxu0
    %v586 = vadd.f32 %v413, %v585
    %v587 = vpop.f32.mrb[0].mxu0
    %588 = vmatprep.mubr.bf16.mxu0 0
    %589 = vmatmul.mubr.bf16.gmra.mrb[0].mxu0 %v508
    %v590 = vpop.f32.mrb[0].mxu0
    %v591 = vadd.f32 %v418, %v590
    %v592 = vpop.f32.mrb[0].mxu0
    %v593 = vpop.f32.mrb[0].mxu0
    %v594 = vadd.f32 %v421, %v593
    %v595 = vpop.f32.mrb[0].mxu0
    %596 = vmatprep.mubr.bf16.mxu0 0
    %597 = vmatmul.mubr.bf16.gmra.mrb[0].mxu0 %v511
    %v598 = vpop.f32.mrb[0].mxu0
    %v599 = vadd.f32 %v426, %v598
    %v600 = vpop.f32.mrb[0].mxu0
    %v601 = vpop.f32.mrb[0].mxu0
    %v602 = vadd.f32 %v429, %v601
    %v603 = vpop.f32.mrb[0].mxu0
    %604 = vmatprep.mubr.bf16.mxu0 0
    %605 = vmatmul.mubr.bf16.gmra.mrb[0].mxu0 %v514
    %v606 = vpop.f32.mrb[0].mxu0
    %v607 = vadd.f32 %v434, %v606
    %v608 = vpop.f32.mrb[0].mxu0
    %v609 = vpop.f32.mrb[0].mxu0
    %v610 = vadd.f32 %v437, %v609
    %v611 = vpop.f32.mrb[0].mxu0
    %612 = vdwg.mxu0
    %v613 = vld [vmem:[#allocation3] sm:$0xe]
    %v614 = vld [vmem:[#allocation3 + $0xc] sm:$0xe]
    %v615 = vld [vmem:[#allocation3 + $0x18] sm:$0xe]
    %v616 = vld [vmem:[#allocation3 + $0x24] sm:$0xe]
    %v617 = vld [vmem:[#allocation3 + $0x30] sm:$0xe]
    %v618 = vld [vmem:[#allocation3 + $0x3c] sm:$0xe]
    %v619 = vld [vmem:[#allocation3 + $0x48] sm:$0xe]
    %v620 = vld [vmem:[#allocation3 + $0x54] sm:$0xe]
    %vm637 = vcmask 1042432
    %vm638 = vcmask 1046532
    %vm639 = vmor %vm637, %vm638
    %v640 = vrot.slane %v613, 5
    %v641 = vrot.slane %v640, 4
    %v642 = vrot.slane %v55, 5
    %v643 = vsel %vm639, %v641, %v642
    %v644 = vrot.slane %v642, 4
    %v645 = vrot.slane %v74, 5
    %v646 = vsel %vm639, %v644, %v645
    %v647 = vrot.slane %v614, 5
    %v648 = vrot.slane %v647, 4
    %v649 = vrot.slane %v57, 5
    %v650 = vsel %vm639, %v648, %v649
    %v651 = vrot.slane %v649, 4
    %v652 = vrot.slane %v75, 5
    %v653 = vsel %vm639, %v651, %v652
    %v654 = vrot.slane %v615, 5
    %v655 = vrot.slane %v654, 4
    %v656 = vrot.slane %v59, 5
    %v657 = vsel %vm639, %v655, %v656
    %v658 = vrot.slane %v656, 4
    %v659 = vrot.slane %v76, 5
    %v660 = vsel %vm639, %v658, %v659
    %v661 = vrot.slane %v616, 5
    %v662 = vrot.slane %v661, 4
    %v663 = vrot.slane %v61, 5
    %v664 = vsel %vm639, %v662, %v663
    %v665 = vrot.slane %v663, 4
    %v666 = vrot.slane %v77, 5
    %v667 = vsel %vm639, %v665, %v666
    %v668 = vrot.slane %v617, 5
    %v669 = vrot.slane %v668, 4
    %v670 = vrot.slane %v63, 5
    %v671 = vsel %vm639, %v669, %v670
    %v672 = vrot.slane %v670, 4
    %v673 = vrot.slane %v78, 5
    %v674 = vsel %vm639, %v672, %v673
    %v675 = vrot.slane %v618, 5
    %v676 = vrot.slane %v675, 4
    %v677 = vrot.slane %v65, 5
    %v678 = vsel %vm639, %v676, %v677
    %v679 = vrot.slane %v677, 4
    %v680 = vrot.slane %v79, 5
    %v681 = vsel %vm639, %v679, %v680
    %v682 = vrot.slane %v619, 5
    %v683 = vrot.slane %v682, 4
    %v684 = vrot.slane %v67, 5
    %v685 = vsel %vm639, %v683, %v684
    %v686 = vrot.slane %v684, 4
    %v687 = vrot.slane %v80, 5
    %v688 = vsel %vm639, %v686, %v687
    %v689 = vrot.slane %v620, 5
    %v690 = vrot.slane %v689, 4
    %v691 = vrot.slane %v69, 5
    %v692 = vsel %vm639, %v690, %v691
    %v693 = vrot.slane %v691, 4
    %v694 = vrot.slane %v81, 5
    %v695 = vsel %vm639, %v693, %v694
    %s696 = scalar_lea.vmem [#allocation6], 32
    %v697 = vld [vmem:[%s696] sm:$0xf]
    %v698 = vld [vmem:[%s696 + $0x4] sm:$0xf]
    %v699 = vld [vmem:[%s696 + $0x8] sm:$0xf]
    %v700 = vld [vmem:[%s696 + $0xc] sm:$0xf]
    %v701 = vunpack.c.l.b16 %v643
    %v702 = vunpack.c.l.b16 %v646
    %v703 = vunpack.c.l.b16 %v650
    %v704 = vunpack.c.l.b16 %v653
    %v705 = vunpack.c.l.b16 %v657
    %v706 = vunpack.c.l.b16 %v660
    %v707 = vunpack.c.l.b16 %v664
    %v708 = vunpack.c.l.b16 %v667
    %v709 = vunpack.c.l.b16 %v671
    %v710 = vunpack.c.l.b16 %v674
    %v711 = vunpack.c.l.b16 %v678
    %v712 = vunpack.c.l.b16 %v681
    %v713 = vunpack.c.l.b16 %v685
    %v714 = vunpack.c.l.b16 %v688
    %v715 = vunpack.c.l.b16 %v692
    %v716 = vunpack.c.l.b16 %v695
    %v717 = vpack.c.b16 %v702, %v701
    %v718 = vpack.c.b16 %v704, %v703
    %v719 = vpack.c.b16 %v706, %v705
    %v720 = vpack.c.b16 %v708, %v707
    %v721 = vpack.c.b16 %v710, %v709
    %v722 = vpack.c.b16 %v712, %v711
    %v723 = vpack.c.b16 %v714, %v713
    %v724 = vpack.c.b16 %v716, %v715
    %v729 = vunpack.c.l.b16 %v697
    %v730 = vunpack.c.l.b16 %v698
    %v731 = vunpack.c.l.b16 %v699
    %v732 = vunpack.c.l.b16 %v700
    %v733 = vpack.c.b16 %v730, %v729
    %v734 = vpack.c.b16 %v732, %v731
    %v738 = vsel %vm318, %v717, 0
    %v741 = vsel %vm318, %v718, 0
    %v744 = vsel %vm318, %v719, 0
    %v747 = vsel %vm318, %v720, 0
    %v750 = vsel %vm318, %v721, 0
    %v753 = vsel %vm318, %v722, 0
    %v756 = vsel %vm318, %v723, 0
    %v759 = vsel %vm318, %v724, 0
    %761 = vmatprep.subr.bf16.mxu0 0
    %762 = vmatpush1.bf16.msra.mxu0 %v733
    %763 = vmatprep.subr.bf16.mxu0 0
    %764 = vmatpush1.bf16.msra.mxu0 %v734
    %765 = vmatprep.subr.bf16.mxu0 0
    %766 = vmatpush1.bf16.msra.mxu0 0
    %767 = vmatprep.subr.bf16.mxu0 0
    %768 = vmatpush1.bf16.msra.mxu0 0
    %769 = vmatprep.subr.bf16.mxu0 0
    %770 = vmatpush1.bf16.msra.mxu0 0
    %771 = vmatprep.subr.bf16.mxu0 0
    %772 = vmatpush1.bf16.msra.mxu0 0
    %773 = vmatprep.subr.bf16.mxu0 0
    %774 = vmatpush1.bf16.msra.mxu0 0
    %775 = vmatprep.subr.bf16.mxu0 0
    %776 = vmatpush1.bf16.msra.mxu0 0
    %777 = vmatprep.subr.bf16.mxu0 0
    %778 = vmatpush1.bf16.msra.mxu0 0
    %779 = vmatprep.subr.bf16.mxu0 0
    %780 = vmatpush1.bf16.msra.mxu0 0
    %781 = vmatprep.subr.bf16.mxu0 0
    %782 = vmatpush1.bf16.msra.mxu0 0
    %783 = vmatprep.subr.bf16.mxu0 0
    %784 = vmatpush1.bf16.msra.mxu0 0
    %785 = vmatprep.subr.bf16.mxu0 0
    %786 = vmatpush1.bf16.msra.mxu0 0
    %787 = vmatprep.subr.bf16.mxu0 0
    %788 = vmatpush1.bf16.msra.mxu0 0
    %789 = vmatprep.subr.bf16.mxu0 0
    %790 = vmatpush1.bf16.msra.mxu0 0
    %791 = vmatprep.subr.bf16.mxu0 0
    %792 = vmatpush1.bf16.msra.mxu0 0
    %793 = vmatprep.mubr.bf16.mxu0 0
    %794 = vmatmul.mubr.bf16.gmra.mrb[0].mxu0 %v738
    %v795 = vpop.f32.mrb[0].mxu0
    %v796 = vadd.f32 0.0, %v795
    %v797 = vpop.f32.mrb[0].mxu0
    %v798 = vpop.f32.mrb[0].mxu0
    %v799 = vadd.f32 0.0, %v798
    %v800 = vpop.f32.mrb[0].mxu0
    %801 = vmatprep.mubr.bf16.mxu0 0
    %802 = vmatmul.mubr.bf16.gmra.mrb[0].mxu0 %v741
    %v803 = vpop.f32.mrb[0].mxu0
    %v804 = vadd.f32 0.0, %v803
    %v805 = vpop.f32.mrb[0].mxu0
    %v806 = vpop.f32.mrb[0].mxu0
    %v807 = vadd.f32 0.0, %v806
    %v808 = vpop.f32.mrb[0].mxu0
    %809 = vmatprep.mubr.bf16.mxu0 0
    %810 = vmatmul.mubr.bf16.gmra.mrb[0].mxu0 %v744
    %v811 = vpop.f32.mrb[0].mxu0
    %v812 = vadd.f32 0.0, %v811
    %v813 = vpop.f32.mrb[0].mxu0
    %v814 = vpop.f32.mrb[0].mxu0
    %v815 = vadd.f32 0.0, %v814
    %v816 = vpop.f32.mrb[0].mxu0
    %817 = vmatprep.mubr.bf16.mxu0 0
    %818 = vmatmul.mubr.bf16.gmra.mrb[0].mxu0 %v747
    %v819 = vpop.f32.mrb[0].mxu0
    %v820 = vadd.f32 0.0, %v819
    %v821 = vpop.f32.mrb[0].mxu0
    %v822 = vpop.f32.mrb[0].mxu0
    %v823 = vadd.f32 0.0, %v822
    %v824 = vpop.f32.mrb[0].mxu0
    %825 = vmatprep.mubr.bf16.mxu0 0
    %826 = vmatmul.mubr.bf16.gmra.mrb[0].mxu0 %v750
    %v827 = vpop.f32.mrb[0].mxu0
    %v828 = vadd.f32 0.0, %v827
    %v829 = vpop.f32.mrb[0].mxu0
    %v830 = vpop.f32.mrb[0].mxu0
    %v831 = vadd.f32 0.0, %v830
    %v832 = vpop.f32.mrb[0].mxu0
    %833 = vmatprep.mubr.bf16.mxu0 0
    %834 = vmatmul.mubr.bf16.gmra.mrb[0].mxu0 %v753
    %v835 = vpop.f32.mrb[0].mxu0
    %v836 = vadd.f32 0.0, %v835
    %v837 = vpop.f32.mrb[0].mxu0
    %v838 = vpop.f32.mrb[0].mxu0
    %v839 = vadd.f32 0.0, %v838
    %v840 = vpop.f32.mrb[0].mxu0
    %841 = vmatprep.mubr.bf16.mxu0 0
    %842 = vmatmul.mubr.bf16.gmra.mrb[0].mxu0 %v756
    %v843 = vpop.f32.mrb[0].mxu0
    %v844 = vadd.f32 0.0, %v843
    %v845 = vpop.f32.mrb[0].mxu0
    %v846 = vpop.f32.mrb[0].mxu0
    %v847 = vadd.f32 0.0, %v846
    %v848 = vpop.f32.mrb[0].mxu0
    %849 = vmatprep.mubr.bf16.mxu0 0
    %850 = vmatmul.mubr.bf16.gmra.mrb[0].mxu0 %v759
    %v851 = vpop.f32.mrb[0].mxu0
    %v852 = vadd.f32 0.0, %v851
    %v853 = vpop.f32.mrb[0].mxu0
    %v854 = vpop.f32.mrb[0].mxu0
    %v855 = vadd.f32 0.0, %v854
    %v856 = vpop.f32.mrb[0].mxu0
    %857 = vdwg.mxu0
    %v858 = vadd.f32 %v551, %v796
    %v859 = vadd.f32 %v554, %v799
    %v860 = vadd.f32 %v559, %v804
    %v861 = vadd.f32 %v562, %v807
    %v862 = vadd.f32 %v567, %v812
    %v863 = vadd.f32 %v570, %v815
    %v864 = vadd.f32 %v575, %v820
    %v865 = vadd.f32 %v578, %v823
    %v866 = vadd.f32 %v583, %v828
    %v867 = vadd.f32 %v586, %v831
    %v868 = vadd.f32 %v591, %v836
    %v869 = vadd.f32 %v594, %v839
    %v870 = vadd.f32 %v599, %v844
    %v871 = vadd.f32 %v602, %v847
    %v872 = vadd.f32 %v607, %v852
    %v873 = vadd.f32 %v610, %v855
    %v874 = vld [vmem:[#allocation3 + $0x8] sm:$0x3]
    %v875 = vld [vmem:[#allocation3 + $0x14] sm:$0x3]
    %v876 = vld [vmem:[#allocation3 + $0x20] sm:$0x3]
    %v877 = vld [vmem:[#allocation3 + $0x2c] sm:$0x3]
    %v878 = vld [vmem:[#allocation3 + $0x38] sm:$0x3]
    %v879 = vld [vmem:[#allocation3 + $0x44] sm:$0x3]
    %v880 = vld [vmem:[#allocation3 + $0x50] sm:$0x3]
    %v881 = vld [vmem:[#allocation3 + $0x5c] sm:$0x3]
    %vm882 = vsmask.f32 2304
    %vm883 = vsmask.f32 6416
    %vm884 = vmor %vm882, %vm883
    %v886 = vshrl.u32 %v613, 16
    %v888 = vrot.slane %v886, 5
    %v889 = vshll.u32 %v613, 16
    %v891 = vrot.slane %v889, 6
    %v892 = vor.u32 %v888, %v891
    %v893 = vrot.slane %v892, 4
    %v894 = vrot.slane %v99, 5
    %v895 = vrot.slane %v95, 6
    %v896 = vor.u32 %v894, %v895
    %v897 = vsel %vm884, %v893, %v896
    %v898 = vrot.slane %v896, 4
    %v900 = vshrl.u32 %v874, 16
    %v902 = vrot.slane %v900, 5
    %v903 = vshll.u32 %v874, 16
    %v905 = vrot.slane %v903, 6
    %v906 = vor.u32 %v902, %v905
    %v907 = vsel %vm884, %v898, %v906
    %v909 = vshrl.u32 %v614, 16
    %v911 = vrot.slane %v909, 5
    %v912 = vshll.u32 %v614, 16
    %v914 = vrot.slane %v912, 6
    %v915 = vor.u32 %v911, %v914
    %v916 = vrot.slane %v915, 4
    %v917 = vrot.slane %v123, 5
    %v918 = vrot.slane %v119, 6
    %v919 = vor.u32 %v917, %v918
    %v920 = vsel %vm884, %v916, %v919
    %v921 = vrot.slane %v919, 4
    %v923 = vshrl.u32 %v875, 16
    %v925 = vrot.slane %v923, 5
    %v926 = vshll.u32 %v875, 16
    %v928 = vrot.slane %v926, 6
    %v929 = vor.u32 %v925, %v928
    %v930 = vsel %vm884, %v921, %v929
    %v932 = vshrl.u32 %v615, 16
    %v934 = vrot.slane %v932, 5
    %v935 = vshll.u32 %v615, 16
    %v937 = vrot.slane %v935, 6
    %v938 = vor.u32 %v934, %v937
    %v939 = vrot.slane %v938, 4
    %v940 = vrot.slane %v147, 5
    %v941 = vrot.slane %v143, 6
    %v942 = vor.u32 %v940, %v941
    %v943 = vsel %vm884, %v939, %v942
    %v944 = vrot.slane %v942, 4
    %v946 = vshrl.u32 %v876, 16
    %v948 = vrot.slane %v946, 5
    %v949 = vshll.u32 %v876, 16
    %v951 = vrot.slane %v949, 6
    %v952 = vor.u32 %v948, %v951
    %v953 = vsel %vm884, %v944, %v952
    %v955 = vshrl.u32 %v616, 16
    %v957 = vrot.slane %v955, 5
    %v958 = vshll.u32 %v616, 16
    %v960 = vrot.slane %v958, 6
    %v961 = vor.u32 %v957, %v960
    %v962 = vrot.slane %v961, 4
    %v963 = vrot.slane %v171, 5
    %v964 = vrot.slane %v167, 6
    %v965 = vor.u32 %v963, %v964
    %v966 = vsel %vm884, %v962, %v965
    %v967 = vrot.slane %v965, 4
    %v969 = vshrl.u32 %v877, 16
    %v971 = vrot.slane %v969, 5
    %v972 = vshll.u32 %v877, 16
    %v974 = vrot.slane %v972, 6
    %v975 = vor.u32 %v971, %v974
    %v976 = vsel %vm884, %v967, %v975
    %v978 = vshrl.u32 %v617, 16
    %v980 = vrot.slane %v978, 5
    %v981 = vshll.u32 %v617, 16
    %v983 = vrot.slane %v981, 6
    %v984 = vor.u32 %v980, %v983
    %v985 = vrot.slane %v984, 4
    %v986 = vrot.slane %v195, 5
    %v987 = vrot.slane %v191, 6
    %v988 = vor.u32 %v986, %v987
    %v989 = vsel %vm884, %v985, %v988
    %v990 = vrot.slane %v988, 4
    %v992 = vshrl.u32 %v878, 16
    %v994 = vrot.slane %v992, 5
    %v995 = vshll.u32 %v878, 16
    %v997 = vrot.slane %v995, 6
    %v998 = vor.u32 %v994, %v997
    %v999 = vsel %vm884, %v990, %v998
    %v1001 = vshrl.u32 %v618, 16
    %v1003 = vrot.slane %v1001, 5
    %v1004 = vshll.u32 %v618, 16
    %v1006 = vrot.slane %v1004, 6
    %v1007 = vor.u32 %v1003, %v1006
    %v1008 = vrot.slane %v1007, 4
    %v1009 = vrot.slane %v219, 5
    %v1010 = vrot.slane %v215, 6
    %v1011 = vor.u32 %v1009, %v1010
    %v1012 = vsel %vm884, %v1008, %v1011
    %v1013 = vrot.slane %v1011, 4
    %v1015 = vshrl.u32 %v879, 16
    %v1017 = vrot.slane %v1015, 5
    %v1018 = vshll.u32 %v879, 16
    %v1020 = vrot.slane %v1018, 6
    %v1021 = vor.u32 %v1017, %v1020
    %v1022 = vsel %vm884, %v1013, %v1021
    %v1024 = vshrl.u32 %v619, 16
    %v1026 = vrot.slane %v1024, 5
    %v1027 = vshll.u32 %v619, 16
    %v1029 = vrot.slane %v1027, 6
    %v1030 = vor.u32 %v1026, %v1029
    %v1031 = vrot.slane %v1030, 4
    %v1032 = vrot.slane %v243, 5
    %v1033 = vrot.slane %v239, 6
    %v1034 = vor.u32 %v1032, %v1033
    %v1035 = vsel %vm884, %v1031, %v1034
    %v1036 = vrot.slane %v1034, 4
    %v1038 = vshrl.u32 %v880, 16
    %v1040 = vrot.slane %v1038, 5
    %v1041 = vshll.u32 %v880, 16
    %v1043 = vrot.slane %v1041, 6
    %v1044 = vor.u32 %v1040, %v1043
    %v1045 = vsel %vm884, %v1036, %v1044
    %v1047 = vshrl.u32 %v620, 16
    %v1049 = vrot.slane %v1047, 5
    %v1050 = vshll.u32 %v620, 16
    %v1052 = vrot.slane %v1050, 6
    %v1053 = vor.u32 %v1049, %v1052
    %v1054 = vrot.slane %v1053, 4
    %v1055 = vrot.slane %v267, 5
    %v1056 = vrot.slane %v263, 6
    %v1057 = vor.u32 %v1055, %v1056
    %v1058 = vsel %vm884, %v1054, %v1057
    %v1059 = vrot.slane %v1057, 4
    %v1061 = vshrl.u32 %v881, 16
    %v1063 = vrot.slane %v1061, 5
    %v1064 = vshll.u32 %v881, 16
    %v1066 = vrot.slane %v1064, 6
    %v1067 = vor.u32 %v1063, %v1066
    %v1068 = vsel %vm884, %v1059, %v1067
    %s1069 = scalar_lea.vmem [#allocation6], 48
    %v1070 = vld [vmem:[%s1069] sm:$0xf]
    %v1071 = vld [vmem:[%s1069 + $0x4] sm:$0xf]
    %v1072 = vld [vmem:[%s1069 + $0x8] sm:$0xf]
    %v1073 = vld [vmem:[%s1069 + $0xc] sm:$0xf]
    %v1074 = vunpack.c.l.b16 %v897
    %v1075 = vunpack.c.l.b16 %v907
    %v1076 = vunpack.c.l.b16 %v920
    %v1077 = vunpack.c.l.b16 %v930
    %v1078 = vunpack.c.l.b16 %v943
    %v1079 = vunpack.c.l.b16 %v953
    %v1080 = vunpack.c.l.b16 %v966
    %v1081 = vunpack.c.l.b16 %v976
    %v1082 = vunpack.c.l.b16 %v989
    %v1083 = vunpack.c.l.b16 %v999
    %v1084 = vunpack.c.l.b16 %v1012
    %v1085 = vunpack.c.l.b16 %v1022
    %v1086 = vunpack.c.l.b16 %v1035
    %v1087 = vunpack.c.l.b16 %v1045
    %v1088 = vunpack.c.l.b16 %v1058
    %v1089 = vunpack.c.l.b16 %v1068
    %v1090 = vpack.c.b16 %v1075, %v1074
    %v1091 = vpack.c.b16 %v1077, %v1076
    %v1092 = vpack.c.b16 %v1079, %v1078
    %v1093 = vpack.c.b16 %v1081, %v1080
    %v1094 = vpack.c.b16 %v1083, %v1082
    %v1095 = vpack.c.b16 %v1085, %v1084
    %v1096 = vpack.c.b16 %v1087, %v1086
    %v1097 = vpack.c.b16 %v1089, %v1088
    %v1102 = vunpack.c.l.b16 %v1070
    %v1103 = vunpack.c.l.b16 %v1071
    %v1104 = vunpack.c.l.b16 %v1072
    %v1105 = vunpack.c.l.b16 %v1073
    %v1106 = vpack.c.b16 %v1103, %v1102
    %v1107 = vpack.c.b16 %v1105, %v1104
    %v1111 = vsel %vm318, %v1090, 0
    %v1114 = vsel %vm318, %v1091, 0
    %v1117 = vsel %vm318, %v1092, 0
    %v1120 = vsel %vm318, %v1093, 0
    %v1123 = vsel %vm318, %v1094, 0
    %v1126 = vsel %vm318, %v1095, 0
    %v1129 = vsel %vm318, %v1096, 0
    %v1132 = vsel %vm318, %v1097, 0
    %1134 = vmatprep.subr.bf16.mxu0 0
    %1135 = vmatpush1.bf16.msra.mxu0 %v1106
    %1136 = vmatprep.subr.bf16.mxu0 0
    %1137 = vmatpush1.bf16.msra.mxu0 %v1107
    %1138 = vmatprep.subr.bf16.mxu0 0
    %1139 = vmatpush1.bf16.msra.mxu0 0
    %1140 = vmatprep.subr.bf16.mxu0 0
    %1141 = vmatpush1.bf16.msra.mxu0 0
    %1142 = vmatprep.subr.bf16.mxu0 0
    %1143 = vmatpush1.bf16.msra.mxu0 0
    %1144 = vmatprep.subr.bf16.mxu0 0
    %1145 = vmatpush1.bf16.msra.mxu0 0
    %1146 = vmatprep.subr.bf16.mxu0 0
    %1147 = vmatpush1.bf16.msra.mxu0 0
    %1148 = vmatprep.subr.bf16.mxu0 0
    %1149 = vmatpush1.bf16.msra.mxu0 0
    %1150 = vmatprep.subr.bf16.mxu0 0
    %1151 = vmatpush1.bf16.msra.mxu0 0
    %1152 = vmatprep.subr.bf16.mxu0 0
    %1153 = vmatpush1.bf16.msra.mxu0 0
    %1154 = vmatprep.subr.bf16.mxu0 0
    %1155 = vmatpush1.bf16.msra.mxu0 0
    %1156 = vmatprep.subr.bf16.mxu0 0
    %1157 = vmatpush1.bf16.msra.mxu0 0
    %1158 = vmatprep.subr.bf16.mxu0 0
    %1159 = vmatpush1.bf16.msra.mxu0 0
    %1160 = vmatprep.subr.bf16.mxu0 0
    %1161 = vmatpush1.bf16.msra.mxu0 0
    %1162 = vmatprep.subr.bf16.mxu0 0
    %1163 = vmatpush1.bf16.msra.mxu0 0
    %1164 = vmatprep.subr.bf16.mxu0 0
    %1165 = vmatpush1.bf16.msra.mxu0 0
    %1166 = vmatprep.mubr.bf16.mxu0 0
    %1167 = vmatmul.mubr.bf16.gmra.mrb[0].mxu0 %v1111
    %v1168 = vpop.f32.mrb[0].mxu0
    %v1169 = vadd.f32 0.0, %v1168
    %v1170 = vpop.f32.mrb[0].mxu0
    %v1171 = vpop.f32.mrb[0].mxu0
    %v1172 = vadd.f32 0.0, %v1171
    %v1173 = vpop.f32.mrb[0].mxu0
    %1174 = vmatprep.mubr.bf16.mxu0 0
    %1175 = vmatmul.mubr.bf16.gmra.mrb[0].mxu0 %v1114
    %v1176 = vpop.f32.mrb[0].mxu0
    %v1177 = vadd.f32 0.0, %v1176
    %v1178 = vpop.f32.mrb[0].mxu0
    %v1179 = vpop.f32.mrb[0].mxu0
    %v1180 = vadd.f32 0.0, %v1179
    %v1181 = vpop.f32.mrb[0].mxu0
    %1182 = vmatprep.mubr.bf16.mxu0 0
    %1183 = vmatmul.mubr.bf16.gmra.mrb[0].mxu0 %v1117
    %v1184 = vpop.f32.mrb[0].mxu0
    %v1185 = vadd.f32 0.0, %v1184
    %v1186 = vpop.f32.mrb[0].mxu0
    %v1187 = vpop.f32.mrb[0].mxu0
    %v1188 = vadd.f32 0.0, %v1187
    %v1189 = vpop.f32.mrb[0].mxu0
    %1190 = vmatprep.mubr.bf16.mxu0 0
    %1191 = vmatmul.mubr.bf16.gmra.mrb[0].mxu0 %v1120
    %v1192 = vpop.f32.mrb[0].mxu0
    %v1193 = vadd.f32 0.0, %v1192
    %v1194 = vpop.f32.mrb[0].mxu0
    %v1195 = vpop.f32.mrb[0].mxu0
    %v1196 = vadd.f32 0.0, %v1195
    %v1197 = vpop.f32.mrb[0].mxu0
    %1198 = vmatprep.mubr.bf16.mxu0 0
    %1199 = vmatmul.mubr.bf16.gmra.mrb[0].mxu0 %v1123
    %v1200 = vpop.f32.mrb[0].mxu0
    %v1201 = vadd.f32 0.0, %v1200
    %v1202 = vpop.f32.mrb[0].mxu0
    %v1203 = vpop.f32.mrb[0].mxu0
    %v1204 = vadd.f32 0.0, %v1203
    %v1205 = vpop.f32.mrb[0].mxu0
    %1206 = vmatprep.mubr.bf16.mxu0 0
    %1207 = vmatmul.mubr.bf16.gmra.mrb[0].mxu0 %v1126
    %v1208 = vpop.f32.mrb[0].mxu0
    %v1209 = vadd.f32 0.0, %v1208
    %v1210 = vpop.f32.mrb[0].mxu0
    %v1211 = vpop.f32.mrb[0].mxu0
    %v1212 = vadd.f32 0.0, %v1211
    %v1213 = vpop.f32.mrb[0].mxu0
    %1214 = vmatprep.mubr.bf16.mxu0 0
    %1215 = vmatmul.mubr.bf16.gmra.mrb[0].mxu0 %v1129
    %v1216 = vpop.f32.mrb[0].mxu0
    %v1217 = vadd.f32 0.0, %v1216
    %v1218 = vpop.f32.mrb[0].mxu0
    %v1219 = vpop.f32.mrb[0].mxu0
    %v1220 = vadd.f32 0.0, %v1219
    %v1221 = vpop.f32.mrb[0].mxu0
    %1222 = vmatprep.mubr.bf16.mxu0 0
    %1223 = vmatmul.mubr.bf16.gmra.mrb[0].mxu0 %v1132
    %v1224 = vpop.f32.mrb[0].mxu0
    %v1225 = vadd.f32 0.0, %v1224
    %v1226 = vpop.f32.mrb[0].mxu0
    %v1227 = vpop.f32.mrb[0].mxu0
    %v1228 = vadd.f32 0.0, %v1227
    %v1229 = vpop.f32.mrb[0].mxu0
    %1230 = vdwg.mxu0
    %v1231 = vadd.f32 %v858, %v1169
    %v1232 = vadd.f32 %v859, %v1172
    %v1233 = vadd.f32 %v860, %v1177
    %v1234 = vadd.f32 %v861, %v1180
    %v1235 = vadd.f32 %v862, %v1185
    %v1236 = vadd.f32 %v863, %v1188
    %v1237 = vadd.f32 %v864, %v1193
    %v1238 = vadd.f32 %v865, %v1196
    %v1239 = vadd.f32 %v866, %v1201
    %v1240 = vadd.f32 %v867, %v1204
    %v1241 = vadd.f32 %v868, %v1209
    %v1242 = vadd.f32 %v869, %v1212
    %v1243 = vadd.f32 %v870, %v1217
    %v1244 = vadd.f32 %v871, %v1220
    %v1245 = vadd.f32 %v872, %v1225
    %v1246 = vadd.f32 %v873, %v1228
    %v1247 = vld [vmem:[#allocation3] sm:$0xc]
    %v1248 = vld [vmem:[#allocation3 + $0xc] sm:$0xc]
    %v1249 = vld [vmem:[#allocation3 + $0x18] sm:$0xc]
    %v1250 = vld [vmem:[#allocation3 + $0x24] sm:$0xc]
    %v1251 = vld [vmem:[#allocation3 + $0x30] sm:$0xc]
    %v1252 = vld [vmem:[#allocation3 + $0x3c] sm:$0xc]
    %v1253 = vld [vmem:[#allocation3 + $0x48] sm:$0xc]
    %v1254 = vld [vmem:[#allocation3 + $0x54] sm:$0xc]
    %vm1271 = vcmask 1041408
    %vm1272 = vcmask 1045508
    %vm1273 = vmor %vm1271, %vm1272
    %v1274 = vrot.slane %v1247, 6
    %v1275 = vrot.slane %v1274, 4
    %v1276 = vrot.slane %v55, 6
    %v1277 = vsel %vm1273, %v1275, %v1276
    %v1278 = vrot.slane %v1276, 4
    %v1279 = vrot.slane %v874, 6
    %v1280 = vsel %vm1273, %v1278, %v1279
    %v1281 = vrot.slane %v1248, 6
    %v1282 = vrot.slane %v1281, 4
    %v1283 = vrot.slane %v57, 6
    %v1284 = vsel %vm1273, %v1282, %v1283
    %v1285 = vrot.slane %v1283, 4
    %v1286 = vrot.slane %v875, 6
    %v1287 = vsel %vm1273, %v1285, %v1286
    %v1288 = vrot.slane %v1249, 6
    %v1289 = vrot.slane %v1288, 4
    %v1290 = vrot.slane %v59, 6
    %v1291 = vsel %vm1273, %v1289, %v1290
    %v1292 = vrot.slane %v1290, 4
    %v1293 = vrot.slane %v876, 6
    %v1294 = vsel %vm1273, %v1292, %v1293
    %v1295 = vrot.slane %v1250, 6
    %v1296 = vrot.slane %v1295, 4
    %v1297 = vrot.slane %v61, 6
    %v1298 = vsel %vm1273, %v1296, %v1297
    %v1299 = vrot.slane %v1297, 4
    %v1300 = vrot.slane %v877, 6
    %v1301 = vsel %vm1273, %v1299, %v1300
    %v1302 = vrot.slane %v1251, 6
    %v1303 = vrot.slane %v1302, 4
    %v1304 = vrot.slane %v63, 6
    %v1305 = vsel %vm1273, %v1303, %v1304
    %v1306 = vrot.slane %v1304, 4
    %v1307 = vrot.slane %v878, 6
    %v1308 = vsel %vm1273, %v1306, %v1307
    %v1309 = vrot.slane %v1252, 6
    %v1310 = vrot.slane %v1309, 4
    %v1311 = vrot.slane %v65, 6
    %v1312 = vsel %vm1273, %v1310, %v1311
    %v1313 = vrot.slane %v1311, 4
    %v1314 = vrot.slane %v879, 6
    %v1315 = vsel %vm1273, %v1313, %v1314
    %v1316 = vrot.slane %v1253, 6
    %v1317 = vrot.slane %v1316, 4
    %v1318 = vrot.slane %v67, 6
    %v1319 = vsel %vm1273, %v1317, %v1318
    %v1320 = vrot.slane %v1318, 4
    %v1321 = vrot.slane %v880, 6
    %v1322 = vsel %vm1273, %v1320, %v1321
    %v1323 = vrot.slane %v1254, 6
    %v1324 = vrot.slane %v1323, 4
    %v1325 = vrot.slane %v69, 6
    %v1326 = vsel %vm1273, %v1324, %v1325
    %v1327 = vrot.slane %v1325, 4
    %v1328 = vrot.slane %v881, 6
    %v1329 = vsel %vm1273, %v1327, %v1328
    %s1330 = scalar_lea.vmem [#allocation6], 64
    %v1331 = vld [vmem:[%s1330] sm:$0xf]
    %v1332 = vld [vmem:[%s1330 + $0x4] sm:$0xf]
    %v1333 = vld [vmem:[%s1330 + $0x8] sm:$0xf]
    %v1334 = vld [vmem:[%s1330 + $0xc] sm:$0xf]
    %v1335 = vunpack.c.l.b16 %v1277
    %v1336 = vunpack.c.l.b16 %v1280
    %v1337 = vunpack.c.l.b16 %v1284
    %v1338 = vunpack.c.l.b16 %v1287
    %v1339 = vunpack.c.l.b16 %v1291
    %v1340 = vunpack.c.l.b16 %v1294
    %v1341 = vunpack.c.l.b16 %v1298
    %v1342 = vunpack.c.l.b16 %v1301
    %v1343 = vunpack.c.l.b16 %v1305
    %v1344 = vunpack.c.l.b16 %v1308
    %v1345 = vunpack.c.l.b16 %v1312
    %v1346 = vunpack.c.l.b16 %v1315
    %v1347 = vunpack.c.l.b16 %v1319
    %v1348 = vunpack.c.l.b16 %v1322
    %v1349 = vunpack.c.l.b16 %v1326
    %v1350 = vunpack.c.l.b16 %v1329
    %v1351 = vpack.c.b16 %v1336, %v1335
    %v1352 = vpack.c.b16 %v1338, %v1337
    %v1353 = vpack.c.b16 %v1340, %v1339
    %v1354 = vpack.c.b16 %v1342, %v1341
    %v1355 = vpack.c.b16 %v1344, %v1343
    %v1356 = vpack.c.b16 %v1346, %v1345
    %v1357 = vpack.c.b16 %v1348, %v1347
    %v1358 = vpack.c.b16 %v1350, %v1349
    %v1363 = vunpack.c.l.b16 %v1331
    %v1364 = vunpack.c.l.b16 %v1332
    %v1365 = vunpack.c.l.b16 %v1333
    %v1366 = vunpack.c.l.b16 %v1334
    %v1367 = vpack.c.b16 %v1364, %v1363
    %v1368 = vpack.c.b16 %v1366, %v1365
    %v1372 = vsel %vm318, %v1351, 0
    %v1375 = vsel %vm318, %v1352, 0
    %v1378 = vsel %vm318, %v1353, 0
    %v1381 = vsel %vm318, %v1354, 0
    %v1384 = vsel %vm318, %v1355, 0
    %v1387 = vsel %vm318, %v1356, 0
    %v1390 = vsel %vm318, %v1357, 0
    %v1393 = vsel %vm318, %v1358, 0
    %1395 = vmatprep.subr.bf16.mxu0 0
    %1396 = vmatpush1.bf16.msra.mxu0 %v1367
    %1397 = vmatprep.subr.bf16.mxu0 0
    %1398 = vmatpush1.bf16.msra.mxu0 %v1368
    %1399 = vmatprep.subr.bf16.mxu0 0
    %1400 = vmatpush1.bf16.msra.mxu0 0
    %1401 = vmatprep.subr.bf16.mxu0 0
    %1402 = vmatpush1.bf16.msra.mxu0 0
    %1403 = vmatprep.subr.bf16.mxu0 0
    %1404 = vmatpush1.bf16.msra.mxu0 0
    %1405 = vmatprep.subr.bf16.mxu0 0
    %1406 = vmatpush1.bf16.msra.mxu0 0
    %1407 = vmatprep.subr.bf16.mxu0 0
    %1408 = vmatpush1.bf16.msra.mxu0 0
    %1409 = vmatprep.subr.bf16.mxu0 0
    %1410 = vmatpush1.bf16.msra.mxu0 0
    %1411 = vmatprep.subr.bf16.mxu0 0
    %1412 = vmatpush1.bf16.msra.mxu0 0
    %1413 = vmatprep.subr.bf16.mxu0 0
    %1414 = vmatpush1.bf16.msra.mxu0 0
    %1415 = vmatprep.subr.bf16.mxu0 0
    %1416 = vmatpush1.bf16.msra.mxu0 0
    %1417 = vmatprep.subr.bf16.mxu0 0
    %1418 = vmatpush1.bf16.msra.mxu0 0
    %1419 = vmatprep.subr.bf16.mxu0 0
    %1420 = vmatpush1.bf16.msra.mxu0 0
    %1421 = vmatprep.subr.bf16.mxu0 0
    %1422 = vmatpush1.bf16.msra.mxu0 0
    %1423 = vmatprep.subr.bf16.mxu0 0
    %1424 = vmatpush1.bf16.msra.mxu0 0
    %1425 = vmatprep.subr.bf16.mxu0 0
    %1426 = vmatpush1.bf16.msra.mxu0 0
    %1427 = vmatprep.mubr.bf16.mxu0 0
    %1428 = vmatmul.mubr.bf16.gmra.mrb[0].mxu0 %v1372
    %v1429 = vpop.f32.mrb[0].mxu0
    %v1430 = vadd.f32 0.0, %v1429
    %v1431 = vpop.f32.mrb[0].mxu0
    %v1432 = vpop.f32.mrb[0].mxu0
    %v1433 = vadd.f32 0.0, %v1432
    %v1434 = vpop.f32.mrb[0].mxu0
    %1435 = vmatprep.mubr.bf16.mxu0 0
    %1436 = vmatmul.mubr.bf16.gmra.mrb[0].mxu0 %v1375
    %v1437 = vpop.f32.mrb[0].mxu0
    %v1438 = vadd.f32 0.0, %v1437
    %v1439 = vpop.f32.mrb[0].mxu0
    %v1440 = vpop.f32.mrb[0].mxu0
    %v1441 = vadd.f32 0.0, %v1440
    %v1442 = vpop.f32.mrb[0].mxu0
    %1443 = vmatprep.mubr.bf16.mxu0 0
    %1444 = vmatmul.mubr.bf16.gmra.mrb[0].mxu0 %v1378
    %v1445 = vpop.f32.mrb[0].mxu0
    %v1446 = vadd.f32 0.0, %v1445
    %v1447 = vpop.f32.mrb[0].mxu0
    %v1448 = vpop.f32.mrb[0].mxu0
    %v1449 = vadd.f32 0.0, %v1448
    %v1450 = vpop.f32.mrb[0].mxu0
    %1451 = vmatprep.mubr.bf16.mxu0 0
    %1452 = vmatmul.mubr.bf16.gmra.mrb[0].mxu0 %v1381
    %v1453 = vpop.f32.mrb[0].mxu0
    %v1454 = vadd.f32 0.0, %v1453
    %v1455 = vpop.f32.mrb[0].mxu0
    %v1456 = vpop.f32.mrb[0].mxu0
    %v1457 = vadd.f32 0.0, %v1456
    %v1458 = vpop.f32.mrb[0].mxu0
    %1459 = vmatprep.mubr.bf16.mxu0 0
    %1460 = vmatmul.mubr.bf16.gmra.mrb[0].mxu0 %v1384
    %v1461 = vpop.f32.mrb[0].mxu0
    %v1462 = vadd.f32 0.0, %v1461
    %v1463 = vpop.f32.mrb[0].mxu0
    %v1464 = vpop.f32.mrb[0].mxu0
    %v1465 = vadd.f32 0.0, %v1464
    %v1466 = vpop.f32.mrb[0].mxu0
    %1467 = vmatprep.mubr.bf16.mxu0 0
    %1468 = vmatmul.mubr.bf16.gmra.mrb[0].mxu0 %v1387
    %v1469 = vpop.f32.mrb[0].mxu0
    %v1470 = vadd.f32 0.0, %v1469
    %v1471 = vpop.f32.mrb[0].mxu0
    %v1472 = vpop.f32.mrb[0].mxu0
    %v1473 = vadd.f32 0.0, %v1472
    %v1474 = vpop.f32.mrb[0].mxu0
    %1475 = vmatprep.mubr.bf16.mxu0 0
    %1476 = vmatmul.mubr.bf16.gmra.mrb[0].mxu0 %v1390
    %v1477 = vpop.f32.mrb[0].mxu0
    %v1478 = vadd.f32 0.0, %v1477
    %v1479 = vpop.f32.mrb[0].mxu0
    %v1480 = vpop.f32.mrb[0].mxu0
    %v1481 = vadd.f32 0.0, %v1480
    %v1482 = vpop.f32.mrb[0].mxu0
    %1483 = vmatprep.mubr.bf16.mxu0 0
    %1484 = vmatmul.mubr.bf16.gmra.mrb[0].mxu0 %v1393
    %v1485 = vpop.f32.mrb[0].mxu0
    %v1486 = vadd.f32 0.0, %v1485
    %v1487 = vpop.f32.mrb[0].mxu0
    %v1488 = vpop.f32.mrb[0].mxu0
    %v1489 = vadd.f32 0.0, %v1488
    %v1490 = vpop.f32.mrb[0].mxu0
    %1491 = vdwg.mxu0
    %v1492 = vadd.f32 %v1231, %v1430
    %v1493 = vadd.f32 %v1232, %v1433
    %v1494 = vadd.f32 %v1233, %v1438
    %v1495 = vadd.f32 %v1234, %v1441
    %v1496 = vadd.f32 %v1235, %v1446
    %v1497 = vadd.f32 %v1236, %v1449
    %v1498 = vadd.f32 %v1237, %v1454
    %v1499 = vadd.f32 %v1238, %v1457
    %v1500 = vadd.f32 %v1239, %v1462
    %v1501 = vadd.f32 %v1240, %v1465
    %v1502 = vadd.f32 %v1241, %v1470
    %v1503 = vadd.f32 %v1242, %v1473
    %v1504 = vadd.f32 %v1243, %v1478
    %v1505 = vadd.f32 %v1244, %v1481
    %v1506 = vadd.f32 %v1245, %v1486
    %v1507 = vadd.f32 %v1246, %v1489
    %v1508 = vld [vmem:[%s2] sm:$0x1]
    %v1510 = vlaneseq
    %v1511 = vshrl.u32 %v1510, 7
    %v1512 = vsub.s32 0, %v1511
    %v1513 = vrot.slane %v1508, %v1512
    %v1515 = vadd.f32 %v1492, %v1513
    %v1516 = vadd.f32 %v1493, %v1513
    %v1517 = vadd.f32 %v1494, %v1513
    %v1518 = vadd.f32 %v1495, %v1513
    %v1519 = vadd.f32 %v1496, %v1513
    %v1520 = vadd.f32 %v1497, %v1513
    %v1521 = vadd.f32 %v1498, %v1513
    %v1522 = vadd.f32 %v1499, %v1513
    %v1523 = vadd.f32 %v1500, %v1513
    %v1524 = vadd.f32 %v1501, %v1513
    %v1525 = vadd.f32 %v1502, %v1513
    %v1526 = vadd.f32 %v1503, %v1513
    %v1527 = vadd.f32 %v1504, %v1513
    %v1528 = vadd.f32 %v1505, %v1513
    %v1529 = vadd.f32 %v1506, %v1513
    %v1530 = vadd.f32 %v1507, %v1513
    %v1531 = vmax.f32 %v1515, 0.0
    %v1532 = vmax.f32 %v1516, 0.0
    %v1533 = vmax.f32 %v1517, 0.0
    %v1534 = vmax.f32 %v1518, 0.0
    %v1535 = vmax.f32 %v1519, 0.0
    %v1536 = vmax.f32 %v1520, 0.0
    %v1537 = vmax.f32 %v1521, 0.0
    %v1538 = vmax.f32 %v1522, 0.0
    %v1539 = vmax.f32 %v1523, 0.0
    %v1540 = vmax.f32 %v1524, 0.0
    %v1541 = vmax.f32 %v1525, 0.0
    %v1542 = vmax.f32 %v1526, 0.0
    %v1543 = vmax.f32 %v1527, 0.0
    %v1544 = vmax.f32 %v1528, 0.0
    %v1545 = vmax.f32 %v1529, 0.0
    %v1546 = vmax.f32 %v1530, 0.0
    %v1547 = vlaneseq
    %v1548 = vshrl.u32 %v1547, 7
    %v1549 = vadd.s32 %v1548, 8
    %v1550 = vld [vmem:[%s3] sm:$0x1]
    %v1551 = vlaneseq
    %v1552 = vshrl.u32 %v1551, 7
    %v1553 = vsub.s32 0, %v1552
    %v1554 = vrot.slane %v1550, %v1553
    %vm1555 = vcmp.lt.s32.totalorder %v1548, %v1554
    %vm1556 = vcmp.lt.s32.totalorder %v1549, %v1554
    %v1557 = vsel %vm1555, 1, 0
    %v1558 = vsel %vm1556, 1, 0
    %v1559 = vcvt.s32.f32 %v1557
    %v1560 = vcvt.s32.f32 %v1558
    %v1561 = vmul.f32 %v1531, %v1559
    %v1562 = vmul.f32 %v1532, %v1560
    %v1563 = vmul.f32 %v1533, %v1559
    %v1564 = vmul.f32 %v1534, %v1560
    %v1565 = vmul.f32 %v1535, %v1559
    %v1566 = vmul.f32 %v1536, %v1560
    %v1567 = vmul.f32 %v1537, %v1559
    %v1568 = vmul.f32 %v1538, %v1560
    %v1569 = vmul.f32 %v1539, %v1559
    %v1570 = vmul.f32 %v1540, %v1560
    %v1571 = vmul.f32 %v1541, %v1559
    %v1572 = vmul.f32 %v1542, %v1560
    %v1573 = vmul.f32 %v1543, %v1559
    %v1574 = vmul.f32 %v1544, %v1560
    %v1575 = vmul.f32 %v1545, %v1559
    %v1576 = vmul.f32 %v1546, %v1560
    %v1577 = vmax.f32 %v1561, %v1562
    %v1578 = vrot.slane %v1577, 4
    %v1579 = vmax.f32 %v1577, %v1578
    %v1580 = vrot.slane %v1579, 2
    %v1581 = vmax.f32 %v1579, %v1580
    %v1582 = vrot.slane %v1581, 1
    %v1583 = vmax.f32 %v1581, %v1582
    %v1584 = vmax.f32 %v1563, %v1564
    %v1585 = vrot.slane %v1584, 4
    %v1586 = vmax.f32 %v1584, %v1585
    %v1587 = vrot.slane %v1586, 2
    %v1588 = vmax.f32 %v1586, %v1587
    %v1589 = vrot.slane %v1588, 1
    %v1590 = vmax.f32 %v1588, %v1589
    %v1591 = vmax.f32 %v1565, %v1566
    %v1592 = vrot.slane %v1591, 4
    %v1593 = vmax.f32 %v1591, %v1592
    %v1594 = vrot.slane %v1593, 2
    %v1595 = vmax.f32 %v1593, %v1594
    %v1596 = vrot.slane %v1595, 1
    %v1597 = vmax.f32 %v1595, %v1596
    %v1598 = vmax.f32 %v1567, %v1568
    %v1599 = vrot.slane %v1598, 4
    %v1600 = vmax.f32 %v1598, %v1599
    %v1601 = vrot.slane %v1600, 2
    %v1602 = vmax.f32 %v1600, %v1601
    %v1603 = vrot.slane %v1602, 1
    %v1604 = vmax.f32 %v1602, %v1603
    %v1605 = vmax.f32 %v1569, %v1570
    %v1606 = vrot.slane %v1605, 4
    %v1607 = vmax.f32 %v1605, %v1606
    %v1608 = vrot.slane %v1607, 2
    %v1609 = vmax.f32 %v1607, %v1608
    %v1610 = vrot.slane %v1609, 1
    %v1611 = vmax.f32 %v1609, %v1610
    %v1612 = vmax.f32 %v1571, %v1572
    %v1613 = vrot.slane %v1612, 4
    %v1614 = vmax.f32 %v1612, %v1613
    %v1615 = vrot.slane %v1614, 2
    %v1616 = vmax.f32 %v1614, %v1615
    %v1617 = vrot.slane %v1616, 1
    %v1618 = vmax.f32 %v1616, %v1617
    %v1619 = vmax.f32 %v1573, %v1574
    %v1620 = vrot.slane %v1619, 4
    %v1621 = vmax.f32 %v1619, %v1620
    %v1622 = vrot.slane %v1621, 2
    %v1623 = vmax.f32 %v1621, %v1622
    %v1624 = vrot.slane %v1623, 1
    %v1625 = vmax.f32 %v1623, %v1624
    %v1626 = vmax.f32 %v1575, %v1576
    %v1627 = vrot.slane %v1626, 4
    %v1628 = vmax.f32 %v1626, %v1627
    %v1629 = vrot.slane %v1628, 2
    %v1630 = vmax.f32 %v1628, %v1629
    %v1631 = vrot.slane %v1630, 1
    %v1632 = vmax.f32 %v1630, %v1631
    %v1633 = vld [vmem:[%s4] sm:$0x1]
    %s1634 = sld [smem:[#allocation2]]
    %v1635 = vstv %s1634
    %vm1644 = vcmask 1041409
    %v1645 = vsel %vm1644, %v1590, %v1583
    %vm1646 = vcmask 1042434
    %v1647 = vsel %vm1646, %v1597, %v1645
    %vm1648 = vcmask 1043459
    %v1649 = vsel %vm1648, %v1604, %v1647
    %vm1650 = vcmask 1044484
    %v1651 = vsel %vm1650, %v1611, %v1649
    %vm1652 = vcmask 1045509
    %v1653 = vsel %vm1652, %v1618, %v1651
    %vm1654 = vcmask 1046534
    %v1655 = vsel %vm1654, %v1625, %v1653
    %vm1656 = vcmask 1047559
    %v1657 = vsel %vm1656, %v1632, %v1655
    %1659 = vmatprep.subr.mxu0 0.0
    %1660 = vmatpush1.xpose.msra.mxu0 %v1657
    %1661 = vmatprep.subr.mxu0 0.0
    %1662 = vmatpush1.xpose.msra.mxu0 0.0
    %1663 = vmatprep.subr.mxu0 0.0
    %1664 = vmatpush1.xpose.msra.mxu0 0.0
    %1665 = vmatprep.subr.mxu0 0.0
    %1666 = vmatpush1.xpose.msra.mxu0 0.0
    %1667 = vmatprep.subr.mxu0 0.0
    %1668 = vmatpush1.xpose.msra.mxu0 0.0
    %1669 = vmatprep.subr.mxu0 0.0
    %1670 = vmatpush1.xpose.msra.mxu0 0.0
    %1671 = vmatprep.subr.mxu0 0.0
    %1672 = vmatpush1.xpose.msra.mxu0 0.0
    %1673 = vmatprep.subr.mxu0 0.0
    %1674 = vmatpush1.xpose.msra.mxu0 0.0
    %1675 = vmatprep.subr.mxu0 0.0
    %1676 = vmatpush1.xpose.msra.mxu0 0.0
    %1677 = vmatprep.subr.mxu0 0.0
    %1678 = vmatpush1.xpose.msra.mxu0 0.0
    %1679 = vmatprep.subr.mxu0 0.0
    %1680 = vmatpush1.xpose.msra.mxu0 0.0
    %1681 = vmatprep.subr.mxu0 0.0
    %1682 = vmatpush1.xpose.msra.mxu0 0.0
    %1683 = vmatprep.subr.mxu0 0.0
    %1684 = vmatpush1.xpose.msra.mxu0 0.0
    %1685 = vmatprep.subr.mxu0 0.0
    %1686 = vmatpush1.xpose.msra.mxu0 0.0
    %1687 = vmatprep.subr.mxu0 0.0
    %1688 = vmatpush1.xpose.msra.mxu0 0.0
    %1689 = vmatprep.subr.mxu0 0.0
    %1690 = vmatpush1.xpose.msra.mxu0 0.0
    %1691 = vmatprep.subr.mxu0 0.0
    %1692 = vmatpush1.xpose.msra.mxu0 0.0
    %1693 = vmatprep.subr.mxu0 0.0
    %1694 = vmatpush1.xpose.msra.mxu0 0.0
    %1695 = vmatprep.subr.mxu0 0.0
    %1696 = vmatpush1.xpose.msra.mxu0 0.0
    %1697 = vmatprep.subr.mxu0 0.0
    %1698 = vmatpush1.xpose.msra.mxu0 0.0
    %1699 = vmatprep.subr.mxu0 0.0
    %1700 = vmatpush1.xpose.msra.mxu0 0.0
    %1701 = vmatprep.subr.mxu0 0.0
    %1702 = vmatpush1.xpose.msra.mxu0 0.0
    %1703 = vmatprep.subr.mxu0 0.0
    %1704 = vmatpush1.xpose.msra.mxu0 0.0
    %1705 = vmatprep.subr.mxu0 0.0
    %1706 = vmatpush1.xpose.msra.mxu0 0.0
    %1707 = vmatprep.subr.mxu0 0.0
    %1708 = vmatpush1.xpose.msra.mxu0 0.0
    %1709 = vmatprep.subr.mxu0 0.0
    %1710 = vmatpush1.xpose.msra.mxu0 0.0
    %1711 = vmatprep.subr.mxu0 0.0
    %1712 = vmatpush1.xpose.msra.mxu0 0.0
    %1713 = vmatprep.subr.mxu0 0.0
    %1714 = vmatpush1.xpose.msra.mxu0 0.0
    %1715 = vmatprep.subr.mxu0 0.0
    %1716 = vmatpush1.xpose.msra.mxu0 0.0
    %1717 = vmatprep.subr.mxu0 0.0
    %1718 = vmatpush1.xpose.msra.mxu0 0.0
    %1719 = vmatprep.subr.mxu0 0.0
    %1720 = vmatpush1.xpose.msra.mxu0 0.0
    %1721 = vmatprep.subr.mxu0 0.0
    %1722 = vmatpush1.xpose.msra.mxu0 0.0
    %1723 = vmatprep.mubr.f32.mxu0 0.0
    %1724 = vmatmul.mubr.f32.gmra.mrb[0].mxu0 %v1633
    %v1725 = vpop.f32.mrb[0].mxu0
    %v1726 = vadd.f32 %v1635, %v1725
    %v1727 = vpop.f32.mrb[0].mxu0
    %1728 = vdwg.mxu0
    %vm1729 = vcmask 57344
    %1730 = vst.msk [vmem:[#allocation8] sm:$0x1] %vm1729, %v1726
    // Predicated region
    $region34: #{tpu_custom_call.1} parent=1 // pred_check
      _
    $region35: #{tpu_custom_call.1} parent=1 // pred_check_branch
      %1732 = sbr.rel (0) target = $region37
    $region36: #{tpu_custom_call.1} parent=1 // pred_region
      %s1734 = ssub.s32 16, 16
      %1735 = vsyncadd [#allocation5], %s1734
      %s1737 = sshll.u32 [#allocation8], 4
      %s1738 = int_to_ptr.vmem [resolvable:$true] %s1737
      %1740 = dma.vmem_to_hbm [thread:$0]  %s1738, 16, %s6, [#allocation5]
    $region37: #{tpu_custom_call.1} parent=1 // pred_fallthru
      _
    // Predicated region
    $region38: #{tpu_custom_call.1} parent=1 // pred_check
      _
    $region39: #{tpu_custom_call.1} parent=1 // pred_check_branch
      %1742 = sbr.rel (0) target = $region41
    $region40: #{tpu_custom_call.1} parent=1 // pred_region
      %1743 = dma.done [#allocation5], 16
    $region41: #{tpu_custom_call.1} parent=1 // pred_fallthru
      _
    %1744 = vsyncpa [#allocation4], 1
    %1745 = vsyncpa [#allocation7], 1
    %1746 = vsyncpa [#allocation5], 1

</llo_original>
